<compile_context>
chip_gen: v7x
topology: tpu7x:2x2x1
jax: 0.10.0
libtpu: 0.0.40
codegen_flags: <defaults>
</compile_context>

<pallas_src>
import jax
import jax.numpy as jnp
from jax.experimental import pallas as pl
from jax.experimental.pallas import tpu as pltpu  # noqa: F401  (TPU backend)


def _actor_critic_lstm_kernel(x_ref, h0_ref, c0_ref,
                              wih_ref, whh_ref, b_ref,
                              whead_ref, bhead_ref,
                              head_ref, hout_ref, cout_ref):
    B, T, _In = x_ref.shape
    H = h0_ref.shape[1]
    H3 = 3 * H

    x = x_ref[...]          # (B, T, In)
    wih = wih_ref[...]      # (In, 4H)  gate order (i, f, o, g)
    whh = whh_ref[...]      # (H, 4H)
    bias = b_ref[...]       # (1, 4H)   fused b_ih + b_hh

    # Hoisted input projection for ALL timesteps: one batched MXU matmul.
    # (B, T, In) x (B, In, 4H) -> (B, T, 4H); broadcasting the weight over the
    # tiny batch is free and keeps the contraction in the supported batched
    # matmul form.
    xw = jax.lax.dot_general(
        x, jnp.broadcast_to(wih, (B,) + wih.shape),
        dimension_numbers=(((2,), (1,)), ((0,), (0,))),
        preferred_element_type=jnp.float32)

    h = h0_ref[...]         # (B, H)
    c = c0_ref[...]         # (B, H)

    # T is small and static: fully unrolled; only h @ Whh is serial.
    for t in range(T):
        gates = (xw[:, t, :]
                 + jnp.dot(h, whh, preferred_element_type=jnp.float32)
                 + bias)                              # (B, 4H)
        sig = jax.nn.sigmoid(gates[:, :H3])           # i | f | o in one EUP push
        g_g = jnp.tanh(gates[:, H3:])                 # g
        i_g = sig[:, :H]
        f_g = sig[:, H:2 * H]
        o_g = sig[:, 2 * H:H3]
        c = f_g * c + i_g * g_g
        h = o_g * jnp.tanh(c)

    hout_ref[...] = h
    cout_ref[...] = c
    # Fused actor/critic head: one (B, H) @ (H, A+1) matmul.
    head_ref[...] = (jnp.dot(h, whead_ref[...],
                             preferred_element_type=jnp.float32)
                     + bhead_ref[...])


def actor_critic_lstm_forward(x, hx, cx, params):
    """x: (B, T, 10), hx/cx: (1, B, H). Returns (policy, value, hx_out, cx_out)."""
    B, T, _In = x.shape
    H = params["whh"].shape[0]
    A = params["whead"].shape[1] - 1

    x = x.astype(jnp.float32)
    h0 = hx[0].astype(jnp.float32)   # (B, H)
    c0 = cx[0].astype(jnp.float32)   # (B, H)

    head, h_out, c_out = pl.pallas_call(
        _actor_critic_lstm_kernel,
        out_shape=(
            jax.ShapeDtypeStruct((B, A + 1), jnp.float32),   # policy | value
            jax.ShapeDtypeStruct((B, H), jnp.float32),       # h_T
            jax.ShapeDtypeStruct((B, H), jnp.float32),       # c_T
        ),
    )(x, h0, c0,
      params["wih"], params["whh"], params["b"],
      params["whead"], params["bhead"])

    policy = head[:, :A]
    value = head[:, A:]
    return policy, value, h_out[None], c_out[None]


def make_params(key, input_size, hidden_size, action_size):
    """Deterministic synthetic parameters (shapes match nn.LSTM / nn.Linear)."""
    ks = jax.random.split(key, 8)
    H, In, A = hidden_size, input_size, action_size
    s = 1.0 / jnp.sqrt(H)
    # PyTorch layout: weight_ih (4H, In), weight_hh (4H, H); gate order (i, f, g, o).
    w_ih = jax.random.uniform(ks[0], (4, H, In), jnp.float32, -s, s)
    w_hh = jax.random.uniform(ks[1], (4, H, H), jnp.float32, -s, s)
    b_ih = jax.random.uniform(ks[2], (4, H), jnp.float32, -s, s)
    b_hh = jax.random.uniform(ks[3], (4, H), jnp.float32, -s, s)
    wa = jax.random.uniform(ks[4], (A, H), jnp.float32, -s, s)   # actor.weight
    ba = jax.random.uniform(ks[5], (A,), jnp.float32, -s, s)
    wc = jax.random.uniform(ks[6], (1, H), jnp.float32, -s, s)   # critic.weight
    bc = jax.random.uniform(ks[7], (1,), jnp.float32, -s, s)

    # Fuse the four gate matmuls into one, re-packed as (i, f, o, g) so the
    # sigmoid gates form a contiguous 3H slice.
    order = (0, 1, 3, 2)   # PyTorch (i, f, g, o) -> packed (i, f, o, g)
    wih = jnp.concatenate([w_ih[i].T for i in order], axis=1)             # (In, 4H)
    whh = jnp.concatenate([w_hh[i].T for i in order], axis=1)             # (H, 4H)
    b = jnp.concatenate([b_ih[i] + b_hh[i] for i in order])[None, :]      # (1, 4H)

    # Merge actor + critic heads.
    whead = jnp.concatenate([wa.T, wc.T], axis=1)                          # (H, A+1)
    bhead = jnp.concatenate([ba, bc])[None, :]                             # (1, A+1)
    return {"wih": wih, "whh": whh, "b": b, "whead": whead, "bhead": bhead}


def reference_forward(x, hx, cx, p):
    """Pure-JAX reference replicating the PyTorch forward (same fused params)."""
    H = p["whh"].shape[0]
    A = p["whead"].shape[1] - 1

    def step(carry, x_t):
        h, c = carry
        gates = x_t @ p["wih"] + h @ p["whh"] + p["b"]
        i = jax.nn.sigmoid(gates[:, :H])
        f = jax.nn.sigmoid(gates[:, H:2 * H])
        o = jax.nn.sigmoid(gates[:, 2 * H:3 * H])
        g = jnp.tanh(gates[:, 3 * H:])
        c = f * c + i * g
        h = o * jnp.tanh(c)
        return (h, c), None

    (h_T, c_T), _ = jax.lax.scan(step, (hx[0], cx[0]),
                                 jnp.transpose(x, (1, 0, 2)))
    head = h_T @ p["whead"] + p["bhead"]
    return head[:, :A], head[:, A:], h_T[None], c_T[None]


if __name__ == "__main__":
    B, T, In, H, A = 2, 8, 10, 32, 4
    key = jax.random.PRNGKey(0)
    kx, kh, kc, kp = jax.random.split(key, 4)

    x = jax.random.normal(kx, (B, T, In), jnp.float32)
    hx = jax.random.normal(kh, (1, B, H), jnp.float32)
    cx = jax.random.normal(kc, (1, B, H), jnp.float32)
    params = make_params(kp, In, H, A)

    policy, value, h_out, c_out = actor_critic_lstm_forward(x, hx, cx, params)
    jax.block_until_ready((policy, value, h_out, c_out))

    ref = reference_forward(x, hx, cx, params)
    for got, want in zip((policy, value, h_out, c_out), ref):
        assert got.shape == want.shape, (got.shape, want.shape)
        assert jnp.allclose(got, want, atol=1e-5, rtol=1e-5), \
            float(jnp.max(jnp.abs(got - want)))

    print("KERNEL_OK")
</pallas_src>

<mosaic_0001>
module attributes {stable_mosaic.version = 11 : i64} {
  func.func @_actor_critic_lstm_kernel(%arg0: memref<2x8x10xf32, #tpu.memory_space<vmem>>, %arg1: memref<2x32xf32, #tpu.memory_space<vmem>>, %arg2: memref<2x32xf32, #tpu.memory_space<vmem>>, %arg3: memref<10x128xf32, #tpu.memory_space<vmem>>, %arg4: memref<32x128xf32, #tpu.memory_space<vmem>>, %arg5: memref<1x128xf32, #tpu.memory_space<vmem>>, %arg6: memref<32x5xf32, #tpu.memory_space<vmem>>, %arg7: memref<1x5xf32, #tpu.memory_space<vmem>>, %arg8: memref<2x5xf32, #tpu.memory_space<vmem>>, %arg9: memref<2x32xf32, #tpu.memory_space<vmem>>, %arg10: memref<2x32xf32, #tpu.memory_space<vmem>>) attributes {dimension_semantics = [], scalar_prefetch = 0 : i64, scratch_operands = 0 : i64, tpu.core_type = #tpu.core_type<tc>} {
    %c0 = arith.constant 0 : index
    %c0_0 = arith.constant 0 : index
    %c0_1 = arith.constant 0 : index
    %0 = vector.load %arg0[%c0, %c0_0, %c0_1] : memref<2x8x10xf32, #tpu.memory_space<vmem>>, vector<2x8x10xf32>
    %c0_2 = arith.constant 0 : index
    %c0_3 = arith.constant 0 : index
    %1 = vector.load %arg3[%c0_2, %c0_3] : memref<10x128xf32, #tpu.memory_space<vmem>>, vector<10x128xf32>
    %c0_4 = arith.constant 0 : index
    %c0_5 = arith.constant 0 : index
    %2 = vector.load %arg4[%c0_4, %c0_5] : memref<32x128xf32, #tpu.memory_space<vmem>>, vector<32x128xf32>
    %c0_6 = arith.constant 0 : index
    %c0_7 = arith.constant 0 : index
    %3 = vector.load %arg5[%c0_6, %c0_7] : memref<1x128xf32, #tpu.memory_space<vmem>>, vector<1x128xf32>
    %4 = vector.shape_cast %1 : vector<10x128xf32> to vector<1x10x128xf32>
    %5 = vector.broadcast %4 : vector<1x10x128xf32> to vector<2x10x128xf32>
    %cst = arith.constant dense<0.000000e+00> : vector<2x8x128xf32>
    %6 = tpu.matmul %0, %5, %cst {dimension_numbers = #tpu.dot_dimension_numbers<[2], [1], [1], [2], [0, 0, 0, 1, 1, 2], [0], [0]>} : vector<2x8x10xf32>, vector<2x10x128xf32>, vector<2x8x128xf32> -> vector<2x8x128xf32>
    %c0_8 = arith.constant 0 : index
    %c0_9 = arith.constant 0 : index
    %7 = vector.load %arg1[%c0_8, %c0_9] : memref<2x32xf32, #tpu.memory_space<vmem>>, vector<2x32xf32>
    %c0_10 = arith.constant 0 : index
    %c0_11 = arith.constant 0 : index
    %8 = vector.load %arg2[%c0_10, %c0_11] : memref<2x32xf32, #tpu.memory_space<vmem>>, vector<2x32xf32>
    %9 = vector.extract_strided_slice %6 {offsets = [0, 0, 0], sizes = [2, 1, 128], strides = [1, 1, 1]} : vector<2x8x128xf32> to vector<2x1x128xf32>
    %10 = vector.shape_cast %9 : vector<2x1x128xf32> to vector<2x128xf32>
    %cst_12 = arith.constant dense<0.000000e+00> : vector<2x128xf32>
    %11 = tpu.matmul %7, %2, %cst_12 {dimension_numbers = #tpu.dot_dimension_numbers<[1], [0], [0], [1], [0, 0, 1, 1], [], []>} : vector<2x32xf32>, vector<32x128xf32>, vector<2x128xf32> -> vector<2x128xf32>
    %12 = arith.addf %10, %11 : vector<2x128xf32>
    %13 = vector.broadcast %3 : vector<1x128xf32> to vector<2x128xf32>
    %14 = arith.addf %12, %13 : vector<2x128xf32>
    %15 = vector.extract_strided_slice %14 {offsets = [0, 0], sizes = [2, 96], strides = [1, 1]} : vector<2x128xf32> to vector<2x96xf32>
    %16 = arith.negf %15 : vector<2x96xf32>
    %17 = math.exp %16 : vector<2x96xf32>
    %cst_13 = arith.constant 1.000000e+00 : f32
    %18 = vector.broadcast %cst_13 : f32 to vector<2x96xf32>
    %19 = arith.addf %18, %17 : vector<2x96xf32>
    %20 = arith.divf %18, %19 : vector<2x96xf32>
    %21 = vector.extract_strided_slice %14 {offsets = [0, 96], sizes = [2, 32], strides = [1, 1]} : vector<2x128xf32> to vector<2x32xf32>
    %22 = math.tanh %21 : vector<2x32xf32>
    %23 = vector.extract_strided_slice %20 {offsets = [0, 0], sizes = [2, 32], strides = [1, 1]} : vector<2x96xf32> to vector<2x32xf32>
    %24 = vector.extract_strided_slice %20 {offsets = [0, 32], sizes = [2, 32], strides = [1, 1]} : vector<2x96xf32> to vector<2x32xf32>
    %25 = vector.extract_strided_slice %20 {offsets = [0, 64], sizes = [2, 32], strides = [1, 1]} : vector<2x96xf32> to vector<2x32xf32>
    %26 = arith.mulf %24, %8 : vector<2x32xf32>
    %27 = arith.mulf %23, %22 : vector<2x32xf32>
    %28 = arith.addf %26, %27 : vector<2x32xf32>
    %29 = math.tanh %28 : vector<2x32xf32>
    %30 = arith.mulf %25, %29 : vector<2x32xf32>
    %31 = vector.extract_strided_slice %6 {offsets = [0, 1, 0], sizes = [2, 1, 128], strides = [1, 1, 1]} : vector<2x8x128xf32> to vector<2x1x128xf32>
    %32 = vector.shape_cast %31 : vector<2x1x128xf32> to vector<2x128xf32>
    %cst_14 = arith.constant dense<0.000000e+00> : vector<2x128xf32>
    %33 = tpu.matmul %30, %2, %cst_14 {dimension_numbers = #tpu.dot_dimension_numbers<[1], [0], [0], [1], [0, 0, 1, 1], [], []>} : vector<2x32xf32>, vector<32x128xf32>, vector<2x128xf32> -> vector<2x128xf32>
    %34 = arith.addf %32, %33 : vector<2x128xf32>
    %35 = vector.broadcast %3 : vector<1x128xf32> to vector<2x128xf32>
    %36 = arith.addf %34, %35 : vector<2x128xf32>
    %37 = vector.extract_strided_slice %36 {offsets = [0, 0], sizes = [2, 96], strides = [1, 1]} : vector<2x128xf32> to vector<2x96xf32>
    %38 = arith.negf %37 : vector<2x96xf32>
    %39 = math.exp %38 : vector<2x96xf32>
    %cst_15 = arith.constant 1.000000e+00 : f32
    %40 = vector.broadcast %cst_15 : f32 to vector<2x96xf32>
    %41 = arith.addf %40, %39 : vector<2x96xf32>
    %42 = arith.divf %40, %41 : vector<2x96xf32>
    %43 = vector.extract_strided_slice %36 {offsets = [0, 96], sizes = [2, 32], strides = [1, 1]} : vector<2x128xf32> to vector<2x32xf32>
    %44 = math.tanh %43 : vector<2x32xf32>
    %45 = vector.extract_strided_slice %42 {offsets = [0, 0], sizes = [2, 32], strides = [1, 1]} : vector<2x96xf32> to vector<2x32xf32>
    %46 = vector.extract_strided_slice %42 {offsets = [0, 32], sizes = [2, 32], strides = [1, 1]} : vector<2x96xf32> to vector<2x32xf32>
    %47 = vector.extract_strided_slice %42 {offsets = [0, 64], sizes = [2, 32], strides = [1, 1]} : vector<2x96xf32> to vector<2x32xf32>
    %48 = arith.mulf %46, %28 : vector<2x32xf32>
    %49 = arith.mulf %45, %44 : vector<2x32xf32>
    %50 = arith.addf %48, %49 : vector<2x32xf32>
    %51 = math.tanh %50 : vector<2x32xf32>
    %52 = arith.mulf %47, %51 : vector<2x32xf32>
    %53 = vector.extract_strided_slice %6 {offsets = [0, 2, 0], sizes = [2, 1, 128], strides = [1, 1, 1]} : vector<2x8x128xf32> to vector<2x1x128xf32>
    %54 = vector.shape_cast %53 : vector<2x1x128xf32> to vector<2x128xf32>
    %cst_16 = arith.constant dense<0.000000e+00> : vector<2x128xf32>
    %55 = tpu.matmul %52, %2, %cst_16 {dimension_numbers = #tpu.dot_dimension_numbers<[1], [0], [0], [1], [0, 0, 1, 1], [], []>} : vector<2x32xf32>, vector<32x128xf32>, vector<2x128xf32> -> vector<2x128xf32>
    %56 = arith.addf %54, %55 : vector<2x128xf32>
    %57 = vector.broadcast %3 : vector<1x128xf32> to vector<2x128xf32>
    %58 = arith.addf %56, %57 : vector<2x128xf32>
    %59 = vector.extract_strided_slice %58 {offsets = [0, 0], sizes = [2, 96], strides = [1, 1]} : vector<2x128xf32> to vector<2x96xf32>
    %60 = arith.negf %59 : vector<2x96xf32>
    %61 = math.exp %60 : vector<2x96xf32>
    %cst_17 = arith.constant 1.000000e+00 : f32
    %62 = vector.broadcast %cst_17 : f32 to vector<2x96xf32>
    %63 = arith.addf %62, %61 : vector<2x96xf32>
    %64 = arith.divf %62, %63 : vector<2x96xf32>
    %65 = vector.extract_strided_slice %58 {offsets = [0, 96], sizes = [2, 32], strides = [1, 1]} : vector<2x128xf32> to vector<2x32xf32>
    %66 = math.tanh %65 : vector<2x32xf32>
    %67 = vector.extract_strided_slice %64 {offsets = [0, 0], sizes = [2, 32], strides = [1, 1]} : vector<2x96xf32> to vector<2x32xf32>
    %68 = vector.extract_strided_slice %64 {offsets = [0, 32], sizes = [2, 32], strides = [1, 1]} : vector<2x96xf32> to vector<2x32xf32>
    %69 = vector.extract_strided_slice %64 {offsets = [0, 64], sizes = [2, 32], strides = [1, 1]} : vector<2x96xf32> to vector<2x32xf32>
    %70 = arith.mulf %68, %50 : vector<2x32xf32>
    %71 = arith.mulf %67, %66 : vector<2x32xf32>
    %72 = arith.addf %70, %71 : vector<2x32xf32>
    %73 = math.tanh %72 : vector<2x32xf32>
    %74 = arith.mulf %69, %73 : vector<2x32xf32>
    %75 = vector.extract_strided_slice %6 {offsets = [0, 3, 0], sizes = [2, 1, 128], strides = [1, 1, 1]} : vector<2x8x128xf32> to vector<2x1x128xf32>
    %76 = vector.shape_cast %75 : vector<2x1x128xf32> to vector<2x128xf32>
    %cst_18 = arith.constant dense<0.000000e+00> : vector<2x128xf32>
    %77 = tpu.matmul %74, %2, %cst_18 {dimension_numbers = #tpu.dot_dimension_numbers<[1], [0], [0], [1], [0, 0, 1, 1], [], []>} : vector<2x32xf32>, vector<32x128xf32>, vector<2x128xf32> -> vector<2x128xf32>
    %78 = arith.addf %76, %77 : vector<2x128xf32>
    %79 = vector.broadcast %3 : vector<1x128xf32> to vector<2x128xf32>
    %80 = arith.addf %78, %79 : vector<2x128xf32>
    %81 = vector.extract_strided_slice %80 {offsets = [0, 0], sizes = [2, 96], strides = [1, 1]} : vector<2x128xf32> to vector<2x96xf32>
    %82 = arith.negf %81 : vector<2x96xf32>
    %83 = math.exp %82 : vector<2x96xf32>
    %cst_19 = arith.constant 1.000000e+00 : f32
    %84 = vector.broadcast %cst_19 : f32 to vector<2x96xf32>
    %85 = arith.addf %84, %83 : vector<2x96xf32>
    %86 = arith.divf %84, %85 : vector<2x96xf32>
    %87 = vector.extract_strided_slice %80 {offsets = [0, 96], sizes = [2, 32], strides = [1, 1]} : vector<2x128xf32> to vector<2x32xf32>
    %88 = math.tanh %87 : vector<2x32xf32>
    %89 = vector.extract_strided_slice %86 {offsets = [0, 0], sizes = [2, 32], strides = [1, 1]} : vector<2x96xf32> to vector<2x32xf32>
    %90 = vector.extract_strided_slice %86 {offsets = [0, 32], sizes = [2, 32], strides = [1, 1]} : vector<2x96xf32> to vector<2x32xf32>
    %91 = vector.extract_strided_slice %86 {offsets = [0, 64], sizes = [2, 32], strides = [1, 1]} : vector<2x96xf32> to vector<2x32xf32>
    %92 = arith.mulf %90, %72 : vector<2x32xf32>
    %93 = arith.mulf %89, %88 : vector<2x32xf32>
    %94 = arith.addf %92, %93 : vector<2x32xf32>
    %95 = math.tanh %94 : vector<2x32xf32>
    %96 = arith.mulf %91, %95 : vector<2x32xf32>
    %97 = vector.extract_strided_slice %6 {offsets = [0, 4, 0], sizes = [2, 1, 128], strides = [1, 1, 1]} : vector<2x8x128xf32> to vector<2x1x128xf32>
    %98 = vector.shape_cast %97 : vector<2x1x128xf32> to vector<2x128xf32>
    %cst_20 = arith.constant dense<0.000000e+00> : vector<2x128xf32>
    %99 = tpu.matmul %96, %2, %cst_20 {dimension_numbers = #tpu.dot_dimension_numbers<[1], [0], [0], [1], [0, 0, 1, 1], [], []>} : vector<2x32xf32>, vector<32x128xf32>, vector<2x128xf32> -> vector<2x128xf32>
    %100 = arith.addf %98, %99 : vector<2x128xf32>
    %101 = vector.broadcast %3 : vector<1x128xf32> to vector<2x128xf32>
    %102 = arith.addf %100, %101 : vector<2x128xf32>
    %103 = vector.extract_strided_slice %102 {offsets = [0, 0], sizes = [2, 96], strides = [1, 1]} : vector<2x128xf32> to vector<2x96xf32>
    %104 = arith.negf %103 : vector<2x96xf32>
    %105 = math.exp %104 : vector<2x96xf32>
    %cst_21 = arith.constant 1.000000e+00 : f32
    %106 = vector.broadcast %cst_21 : f32 to vector<2x96xf32>
    %107 = arith.addf %106, %105 : vector<2x96xf32>
    %108 = arith.divf %106, %107 : vector<2x96xf32>
    %109 = vector.extract_strided_slice %102 {offsets = [0, 96], sizes = [2, 32], strides = [1, 1]} : vector<2x128xf32> to vector<2x32xf32>
    %110 = math.tanh %109 : vector<2x32xf32>
    %111 = vector.extract_strided_slice %108 {offsets = [0, 0], sizes = [2, 32], strides = [1, 1]} : vector<2x96xf32> to vector<2x32xf32>
    %112 = vector.extract_strided_slice %108 {offsets = [0, 32], sizes = [2, 32], strides = [1, 1]} : vector<2x96xf32> to vector<2x32xf32>
    %113 = vector.extract_strided_slice %108 {offsets = [0, 64], sizes = [2, 32], strides = [1, 1]} : vector<2x96xf32> to vector<2x32xf32>
    %114 = arith.mulf %112, %94 : vector<2x32xf32>
    %115 = arith.mulf %111, %110 : vector<2x32xf32>
    %116 = arith.addf %114, %115 : vector<2x32xf32>
    %117 = math.tanh %116 : vector<2x32xf32>
    %118 = arith.mulf %113, %117 : vector<2x32xf32>
    %119 = vector.extract_strided_slice %6 {offsets = [0, 5, 0], sizes = [2, 1, 128], strides = [1, 1, 1]} : vector<2x8x128xf32> to vector<2x1x128xf32>
    %120 = vector.shape_cast %119 : vector<2x1x128xf32> to vector<2x128xf32>
    %cst_22 = arith.constant dense<0.000000e+00> : vector<2x128xf32>
    %121 = tpu.matmul %118, %2, %cst_22 {dimension_numbers = #tpu.dot_dimension_numbers<[1], [0], [0], [1], [0, 0, 1, 1], [], []>} : vector<2x32xf32>, vector<32x128xf32>, vector<2x128xf32> -> vector<2x128xf32>
    %122 = arith.addf %120, %121 : vector<2x128xf32>
    %123 = vector.broadcast %3 : vector<1x128xf32> to vector<2x128xf32>
    %124 = arith.addf %122, %123 : vector<2x128xf32>
    %125 = vector.extract_strided_slice %124 {offsets = [0, 0], sizes = [2, 96], strides = [1, 1]} : vector<2x128xf32> to vector<2x96xf32>
    %126 = arith.negf %125 : vector<2x96xf32>
    %127 = math.exp %126 : vector<2x96xf32>
    %cst_23 = arith.constant 1.000000e+00 : f32
    %128 = vector.broadcast %cst_23 : f32 to vector<2x96xf32>
    %129 = arith.addf %128, %127 : vector<2x96xf32>
    %130 = arith.divf %128, %129 : vector<2x96xf32>
    %131 = vector.extract_strided_slice %124 {offsets = [0, 96], sizes = [2, 32], strides = [1, 1]} : vector<2x128xf32> to vector<2x32xf32>
    %132 = math.tanh %131 : vector<2x32xf32>
    %133 = vector.extract_strided_slice %130 {offsets = [0, 0], sizes = [2, 32], strides = [1, 1]} : vector<2x96xf32> to vector<2x32xf32>
    %134 = vector.extract_strided_slice %130 {offsets = [0, 32], sizes = [2, 32], strides = [1, 1]} : vector<2x96xf32> to vector<2x32xf32>
    %135 = vector.extract_strided_slice %130 {offsets = [0, 64], sizes = [2, 32], strides = [1, 1]} : vector<2x96xf32> to vector<2x32xf32>
    %136 = arith.mulf %134, %116 : vector<2x32xf32>
    %137 = arith.mulf %133, %132 : vector<2x32xf32>
    %138 = arith.addf %136, %137 : vector<2x32xf32>
    %139 = math.tanh %138 : vector<2x32xf32>
    %140 = arith.mulf %135, %139 : vector<2x32xf32>
    %141 = vector.extract_strided_slice %6 {offsets = [0, 6, 0], sizes = [2, 1, 128], strides = [1, 1, 1]} : vector<2x8x128xf32> to vector<2x1x128xf32>
    %142 = vector.shape_cast %141 : vector<2x1x128xf32> to vector<2x128xf32>
    %cst_24 = arith.constant dense<0.000000e+00> : vector<2x128xf32>
    %143 = tpu.matmul %140, %2, %cst_24 {dimension_numbers = #tpu.dot_dimension_numbers<[1], [0], [0], [1], [0, 0, 1, 1], [], []>} : vector<2x32xf32>, vector<32x128xf32>, vector<2x128xf32> -> vector<2x128xf32>
    %144 = arith.addf %142, %143 : vector<2x128xf32>
    %145 = vector.broadcast %3 : vector<1x128xf32> to vector<2x128xf32>
    %146 = arith.addf %144, %145 : vector<2x128xf32>
    %147 = vector.extract_strided_slice %146 {offsets = [0, 0], sizes = [2, 96], strides = [1, 1]} : vector<2x128xf32> to vector<2x96xf32>
    %148 = arith.negf %147 : vector<2x96xf32>
    %149 = math.exp %148 : vector<2x96xf32>
    %cst_25 = arith.constant 1.000000e+00 : f32
    %150 = vector.broadcast %cst_25 : f32 to vector<2x96xf32>
    %151 = arith.addf %150, %149 : vector<2x96xf32>
    %152 = arith.divf %150, %151 : vector<2x96xf32>
    %153 = vector.extract_strided_slice %146 {offsets = [0, 96], sizes = [2, 32], strides = [1, 1]} : vector<2x128xf32> to vector<2x32xf32>
    %154 = math.tanh %153 : vector<2x32xf32>
    %155 = vector.extract_strided_slice %152 {offsets = [0, 0], sizes = [2, 32], strides = [1, 1]} : vector<2x96xf32> to vector<2x32xf32>
    %156 = vector.extract_strided_slice %152 {offsets = [0, 32], sizes = [2, 32], strides = [1, 1]} : vector<2x96xf32> to vector<2x32xf32>
    %157 = vector.extract_strided_slice %152 {offsets = [0, 64], sizes = [2, 32], strides = [1, 1]} : vector<2x96xf32> to vector<2x32xf32>
    %158 = arith.mulf %156, %138 : vector<2x32xf32>
    %159 = arith.mulf %155, %154 : vector<2x32xf32>
    %160 = arith.addf %158, %159 : vector<2x32xf32>
    %161 = math.tanh %160 : vector<2x32xf32>
    %162 = arith.mulf %157, %161 : vector<2x32xf32>
    %163 = vector.extract_strided_slice %6 {offsets = [0, 7, 0], sizes = [2, 1, 128], strides = [1, 1, 1]} : vector<2x8x128xf32> to vector<2x1x128xf32>
    %164 = vector.shape_cast %163 : vector<2x1x128xf32> to vector<2x128xf32>
    %cst_26 = arith.constant dense<0.000000e+00> : vector<2x128xf32>
    %165 = tpu.matmul %162, %2, %cst_26 {dimension_numbers = #tpu.dot_dimension_numbers<[1], [0], [0], [1], [0, 0, 1, 1], [], []>} : vector<2x32xf32>, vector<32x128xf32>, vector<2x128xf32> -> vector<2x128xf32>
    %166 = arith.addf %164, %165 : vector<2x128xf32>
    %167 = vector.broadcast %3 : vector<1x128xf32> to vector<2x128xf32>
    %168 = arith.addf %166, %167 : vector<2x128xf32>
    %169 = vector.extract_strided_slice %168 {offsets = [0, 0], sizes = [2, 96], strides = [1, 1]} : vector<2x128xf32> to vector<2x96xf32>
    %170 = arith.negf %169 : vector<2x96xf32>
    %171 = math.exp %170 : vector<2x96xf32>
    %cst_27 = arith.constant 1.000000e+00 : f32
    %172 = vector.broadcast %cst_27 : f32 to vector<2x96xf32>
    %173 = arith.addf %172, %171 : vector<2x96xf32>
    %174 = arith.divf %172, %173 : vector<2x96xf32>
    %175 = vector.extract_strided_slice %168 {offsets = [0, 96], sizes = [2, 32], strides = [1, 1]} : vector<2x128xf32> to vector<2x32xf32>
    %176 = math.tanh %175 : vector<2x32xf32>
    %177 = vector.extract_strided_slice %174 {offsets = [0, 0], sizes = [2, 32], strides = [1, 1]} : vector<2x96xf32> to vector<2x32xf32>
    %178 = vector.extract_strided_slice %174 {offsets = [0, 32], sizes = [2, 32], strides = [1, 1]} : vector<2x96xf32> to vector<2x32xf32>
    %179 = vector.extract_strided_slice %174 {offsets = [0, 64], sizes = [2, 32], strides = [1, 1]} : vector<2x96xf32> to vector<2x32xf32>
    %180 = arith.mulf %178, %160 : vector<2x32xf32>
    %181 = arith.mulf %177, %176 : vector<2x32xf32>
    %182 = arith.addf %180, %181 : vector<2x32xf32>
    %183 = math.tanh %182 : vector<2x32xf32>
    %184 = arith.mulf %179, %183 : vector<2x32xf32>
    %c0_28 = arith.constant 0 : index
    %c0_29 = arith.constant 0 : index
    %185 = vector.load %arg9[%c0_28, %c0_29] : memref<2x32xf32, #tpu.memory_space<vmem>>, vector<2x32xf32>
    tpu.vector_store %arg9[%c0_28, %c0_29], %184 {strides = array<i32>} : memref<2x32xf32, #tpu.memory_space<vmem>>, vector<2x32xf32>,
    %c0_30 = arith.constant 0 : index
    %c0_31 = arith.constant 0 : index
    %186 = vector.load %arg10[%c0_30, %c0_31] : memref<2x32xf32, #tpu.memory_space<vmem>>, vector<2x32xf32>
    tpu.vector_store %arg10[%c0_30, %c0_31], %182 {strides = array<i32>} : memref<2x32xf32, #tpu.memory_space<vmem>>, vector<2x32xf32>,
    %c0_32 = arith.constant 0 : index
    %c0_33 = arith.constant 0 : index
    %187 = vector.load %arg6[%c0_32, %c0_33] : memref<32x5xf32, #tpu.memory_space<vmem>>, vector<32x5xf32>
    %cst_34 = arith.constant dense<0.000000e+00> : vector<2x5xf32>
    %188 = tpu.matmul %184, %187, %cst_34 {dimension_numbers = #tpu.dot_dimension_numbers<[1], [0], [0], [1], [0, 0, 1, 1], [], []>} : vector<2x32xf32>, vector<32x5xf32>, vector<2x5xf32> -> vector<2x5xf32>
    %c0_35 = arith.constant 0 : index
    %c0_36 = arith.constant 0 : index
    %189 = vector.load %arg7[%c0_35, %c0_36] : memref<1x5xf32, #tpu.memory_space<vmem>>, vector<1x5xf32>
    %190 = vector.broadcast %189 : vector<1x5xf32> to vector<2x5xf32>
    %191 = arith.addf %188, %190 : vector<2x5xf32>
    %c0_37 = arith.constant 0 : index
    %c0_38 = arith.constant 0 : index
    %192 = vector.load %arg8[%c0_37, %c0_38] : memref<2x5xf32, #tpu.memory_space<vmem>>, vector<2x5xf32>
    tpu.vector_store %arg8[%c0_37, %c0_38], %191 {strides = array<i32>} : memref<2x5xf32, #tpu.memory_space<vmem>>, vector<2x5xf32>,
    return
  }
}

</mosaic_0001>

<llo_original>
// kernel: tpu_custom_call.1
$region0: #{tpu_custom_call.1}
  #allocation0 [shape = 'u32[]', space=smem, size = 0x4, offset = 0x4, fixed_abs, tag = 'smem constant byte address 0x4 - core index']
  #allocation1 [shape = 'u32[144,128]{1,0:T(1,128)}', space=vmem, size = 0x12000, scoped, tag = 'internal scratch']
  %s0 = inlined_call_operand.vmem [shape: f32[2,8,10], index: 0, kind: input, shape index: {}]
  %s1 = inlined_call_operand.vmem [shape: f32[2,32], index: 1, kind: input, shape index: {}]
  %s2 = inlined_call_operand.hbm [shape: f32[2,32], index: 2, kind: input, shape index: {}]
  %s3 = inlined_call_operand.hbm [shape: f32[10,128], index: 3, kind: input, shape index: {}]
  %s4 = inlined_call_operand.vmem [shape: f32[32,128], index: 4, kind: input, shape index: {}]
  %s5 = inlined_call_operand.hbm [shape: f32[1,128], index: 5, kind: input, shape index: {}]
  %s6 = inlined_call_operand.vmem [shape: f32[32,5], index: 6, kind: input, shape index: {}]
  %s7 = inlined_call_operand.vmem [shape: f32[1,5], index: 7, kind: input, shape index: {}]
  %s8 = inlined_call_operand.hbm [shape: f32[2,5], index: 8, kind: output, shape index: {0}]
  %s9 = inlined_call_operand.hbm [shape: f32[2,32], index: 9, kind: output, shape index: {1}]
  %s10 = inlined_call_operand.hbm [shape: f32[2,32], index: 10, kind: output, shape index: {2}]
  %11 = xla_tuple %s8, %s9, %s10
  %s12 = sld [smem:[#allocation0]]
  $region70: #{tpu_custom_call.1} parent=0
    _
  %s14 = ssub.s32 1, %s12
  %s15 = scalar_select 0, %s14, %s12
  $region1: #{tpu_custom_call.1} parent=0
    #allocation2 [shape = 'u8[1024]{0}', space=vmem, size = 0x400, scoped, tag = 'input window, operand 2, single buffered']
    #allocation3 [shape = 's32[1]{0}', space=sflag, size = 0x4, scoped, tag = 'scoped memory for tpu_custom_call.1']
    #allocation4 [shape = 's32[1]{0}', space=sflag, size = 0x4, scoped, tag = 'scoped memory for tpu_custom_call.1']
    #allocation5 [shape = 'u8[8192]{0}', space=vmem, size = 0x2000, scoped, tag = 'input window, operand 3, single buffered']
    #allocation6 [shape = 's32[1]{0}', space=sflag, size = 0x4, scoped, tag = 'scoped memory for tpu_custom_call.1']
    #allocation7 [shape = 'u8[512]{0}', space=vmem, size = 0x400, scoped, tag = 'input window, operand 5, single buffered']
    #allocation8 [shape = 'u8[1024]{0}', space=vmem, size = 0x400, scoped, tag = 'output window, operand 0, single buffered']
    #allocation9 [shape = 'u8[1024]{0}', space=vmem, size = 0x400, scoped, tag = 'output window, operand 1, single buffered']
    #allocation10 [shape = 's32[1]{0}', space=sflag, size = 0x4, scoped, tag = 'scoped memory for tpu_custom_call.1']
    #allocation11 [shape = 'u8[1024]{0}', space=vmem, size = 0x400, scoped, tag = 'output window, operand 2, single buffered']
    %16 = vsyncpa [#allocation3], 0
    %17 = vsyncpa [#allocation6], 0
    %18 = vsyncpa [#allocation4], 0
    %19 = vsyncpa [#allocation10], 0
    // Predicated region
    $region2: #{tpu_custom_call.1} parent=1 // pred_check
      _
    $region3: #{tpu_custom_call.1} parent=1 // pred_check_branch
      %21 = sbr.rel (0) target = $region5
    $region4: #{tpu_custom_call.1} parent=1 // pred_region
      _
    $region5: #{tpu_custom_call.1} parent=1 // pred_fallthru
      _
    // Predicated region
    $region6: #{tpu_custom_call.1} parent=1 // pred_check
      _
    $region7: #{tpu_custom_call.1} parent=1 // pred_check_branch
      %23 = sbr.rel (0) target = $region9
    $region8: #{tpu_custom_call.1} parent=1 // pred_region
      _
    $region9: #{tpu_custom_call.1} parent=1 // pred_fallthru
      _
    // Predicated region
    $region10: #{tpu_custom_call.1} parent=1 // pred_check
      _
    $region11: #{tpu_custom_call.1} parent=1 // pred_check_branch
      %25 = sbr.rel (0) target = $region13
    $region12: #{tpu_custom_call.1} parent=1 // pred_region
      %s27 = ssub.s32 32, 32
      %28 = vsyncadd [#allocation3], %s27
      %s30 = sshll.u32 [#allocation2], 4
      %s31 = int_to_ptr.vmem [resolvable:$true] %s30
      %33 = dma.hbm_to_vmem [thread:$0]  %s2, 32, %s31, [#allocation3]
    $region13: #{tpu_custom_call.1} parent=1 // pred_fallthru
      _
    // Predicated region
    $region14: #{tpu_custom_call.1} parent=1 // pred_check
      _
    $region15: #{tpu_custom_call.1} parent=1 // pred_check_branch
      %35 = sbr.rel (0) target = $region17
    $region16: #{tpu_custom_call.1} parent=1 // pred_region
      %s37 = ssub.s32 256, 256
      %38 = vsyncadd [#allocation6], %s37
      %s39 = sshll.u32 [#allocation5], 4
      %s40 = int_to_ptr.vmem [resolvable:$true] %s39
      %45 = dma.hbm_to_vmem [thread:$0]  %s3, 256, %s40, [#allocation6], 128, 128, 8
    $region17: #{tpu_custom_call.1} parent=1 // pred_fallthru
      _
    // Predicated region
    $region18: #{tpu_custom_call.1} parent=1 // pred_check
      _
    $region19: #{tpu_custom_call.1} parent=1 // pred_check_branch
      %47 = sbr.rel (0) target = $region21
    $region20: #{tpu_custom_call.1} parent=1 // pred_region
      _
    $region21: #{tpu_custom_call.1} parent=1 // pred_fallthru
      _
    // Predicated region
    $region22: #{tpu_custom_call.1} parent=1 // pred_check
      _
    $region23: #{tpu_custom_call.1} parent=1 // pred_check_branch
      %49 = sbr.rel (0) target = $region25
    $region24: #{tpu_custom_call.1} parent=1 // pred_region
      %s51 = ssub.s32 16, 16
      %52 = vsyncadd [#allocation6], %s51
      %s54 = sshll.u32 [#allocation7], 4
      %s55 = int_to_ptr.vmem [resolvable:$true] %s54
      %57 = dma.hbm_to_vmem [thread:$0]  %s5, 16, %s55, [#allocation6]
    $region25: #{tpu_custom_call.1} parent=1 // pred_fallthru
      _
    // Predicated region
    $region26: #{tpu_custom_call.1} parent=1 // pred_check
      _
    $region27: #{tpu_custom_call.1} parent=1 // pred_check_branch
      %59 = sbr.rel (0) target = $region29
    $region28: #{tpu_custom_call.1} parent=1 // pred_region
      _
    $region29: #{tpu_custom_call.1} parent=1 // pred_fallthru
      _
    // Predicated region
    $region30: #{tpu_custom_call.1} parent=1 // pred_check
      _
    $region31: #{tpu_custom_call.1} parent=1 // pred_check_branch
      %61 = sbr.rel (0) target = $region33
    $region32: #{tpu_custom_call.1} parent=1 // pred_region
      _
    $region33: #{tpu_custom_call.1} parent=1 // pred_fallthru
      _
    // Predicated region
    $region34: #{tpu_custom_call.1} parent=1 // pred_check
      _
    $region35: #{tpu_custom_call.1} parent=1 // pred_check_branch
      %63 = sbr.rel (0) target = $region37
    $region36: #{tpu_custom_call.1} parent=1 // pred_region
      %64 = dma.done [#allocation3], 32
    $region37: #{tpu_custom_call.1} parent=1 // pred_fallthru
      _
    // Predicated region
    $region38: #{tpu_custom_call.1} parent=1 // pred_check
      _
    $region39: #{tpu_custom_call.1} parent=1 // pred_check_branch
      %66 = sbr.rel (0) target = $region41
    $region40: #{tpu_custom_call.1} parent=1 // pred_region
      %67 = dma.done [#allocation6], 256
    $region41: #{tpu_custom_call.1} parent=1 // pred_fallthru
      _
    // Predicated region
    $region42: #{tpu_custom_call.1} parent=1 // pred_check
      _
    $region43: #{tpu_custom_call.1} parent=1 // pred_check_branch
      %69 = sbr.rel (0) target = $region45
    $region44: #{tpu_custom_call.1} parent=1 // pred_region
      %70 = dma.done [#allocation6], 16
    $region45: #{tpu_custom_call.1} parent=1 // pred_fallthru
      _
    %v71 = vld [vmem:[%s0] sm:$0xff]
    %v72 = vld [vmem:[%s0 + $0x8] sm:$0xff]
    %v73 = vld [vmem:[#allocation5] sm:$0xff]
    %v74 = vld [vmem:[#allocation5 + $0x8] sm:$0x3]
    %v75 = vld [vmem:[%s4] sm:$0xff]
    %v76 = vld [vmem:[%s4 + $0x8] sm:$0xff]
    %v77 = vld [vmem:[%s4 + $0x10] sm:$0xff]
    %v78 = vld [vmem:[%s4 + $0x18] sm:$0xff]
    %v79 = vld [vmem:[#allocation7] sm:$0x1]
    %vm80 = vcmask 80896
    %v82 = vsel %vm80, %v71, 0
    %vm84 = vcmask 1041408
    %v86 = vsel %vm84, %v74, 0
    %88 = vmatprep.subr.mxu0 0.0
    %89 = vmatpush1.msra.mxu0 %v73
    %90 = vmatprep.subr.mxu0 0.0
    %91 = vmatpush1.msra.mxu0 %v86
    %92 = vmatprep.subr.mxu0 0.0
    %93 = vmatpush1.msra.mxu0 0.0
    %94 = vmatprep.subr.mxu0 0.0
    %95 = vmatpush1.msra.mxu0 0.0
    %96 = vmatprep.subr.mxu0 0.0
    %97 = vmatpush1.msra.mxu0 0.0
    %98 = vmatprep.subr.mxu0 0.0
    %99 = vmatpush1.msra.mxu0 0.0
    %100 = vmatprep.subr.mxu0 0.0
    %101 = vmatpush1.msra.mxu0 0.0
    %102 = vmatprep.subr.mxu0 0.0
    %103 = vmatpush1.msra.mxu0 0.0
    %104 = vmatprep.subr.mxu0 0.0
    %105 = vmatpush1.msra.mxu0 0.0
    %106 = vmatprep.subr.mxu0 0.0
    %107 = vmatpush1.msra.mxu0 0.0
    %108 = vmatprep.subr.mxu0 0.0
    %109 = vmatpush1.msra.mxu0 0.0
    %110 = vmatprep.subr.mxu0 0.0
    %111 = vmatpush1.msra.mxu0 0.0
    %112 = vmatprep.subr.mxu0 0.0
    %113 = vmatpush1.msra.mxu0 0.0
    %114 = vmatprep.subr.mxu0 0.0
    %115 = vmatpush1.msra.mxu0 0.0
    %116 = vmatprep.subr.mxu0 0.0
    %117 = vmatpush1.msra.mxu0 0.0
    %118 = vmatprep.subr.mxu0 0.0
    %119 = vmatpush1.msra.mxu0 0.0
    %120 = vmatprep.subr.mxu0 0.0
    %121 = vmatpush1.msra.mxu0 0.0
    %122 = vmatprep.subr.mxu0 0.0
    %123 = vmatpush1.msra.mxu0 0.0
    %124 = vmatprep.subr.mxu0 0.0
    %125 = vmatpush1.msra.mxu0 0.0
    %126 = vmatprep.subr.mxu0 0.0
    %127 = vmatpush1.msra.mxu0 0.0
    %128 = vmatprep.subr.mxu0 0.0
    %129 = vmatpush1.msra.mxu0 0.0
    %130 = vmatprep.subr.mxu0 0.0
    %131 = vmatpush1.msra.mxu0 0.0
    %132 = vmatprep.subr.mxu0 0.0
    %133 = vmatpush1.msra.mxu0 0.0
    %134 = vmatprep.subr.mxu0 0.0
    %135 = vmatpush1.msra.mxu0 0.0
    %136 = vmatprep.subr.mxu0 0.0
    %137 = vmatpush1.msra.mxu0 0.0
    %138 = vmatprep.subr.mxu0 0.0
    %139 = vmatpush1.msra.mxu0 0.0
    %140 = vmatprep.subr.mxu0 0.0
    %141 = vmatpush1.msra.mxu0 0.0
    %142 = vmatprep.subr.mxu0 0.0
    %143 = vmatpush1.msra.mxu0 0.0
    %144 = vmatprep.subr.mxu0 0.0
    %145 = vmatpush1.msra.mxu0 0.0
    %146 = vmatprep.subr.mxu0 0.0
    %147 = vmatpush1.msra.mxu0 0.0
    %148 = vmatprep.subr.mxu0 0.0
    %149 = vmatpush1.msra.mxu0 0.0
    %150 = vmatprep.subr.mxu0 0.0
    %151 = vmatpush1.msra.mxu0 0.0
    %152 = vmatprep.mubr.f32.mxu0 0.0
    %153 = vmatmul.mubr.f32.gmra.mrb[0].mxu0 %v82
    %v154 = vpop.f32.mrb[0].mxu0
    %v155 = vadd.f32 0.0, %v154
    %v156 = vpop.f32.mrb[0].mxu0
    %157 = vdwg.mxu0
    %v159 = vsel %vm80, %v72, 0
    %161 = vmatprep.subr.mxu0 0.0
    %162 = vmatpush1.msra.mxu0 %v73
    %163 = vmatprep.subr.mxu0 0.0
    %164 = vmatpush1.msra.mxu0 %v86
    %165 = vmatprep.subr.mxu0 0.0
    %166 = vmatpush1.msra.mxu0 0.0
    %167 = vmatprep.subr.mxu0 0.0
    %168 = vmatpush1.msra.mxu0 0.0
    %169 = vmatprep.subr.mxu0 0.0
    %170 = vmatpush1.msra.mxu0 0.0
    %171 = vmatprep.subr.mxu0 0.0
    %172 = vmatpush1.msra.mxu0 0.0
    %173 = vmatprep.subr.mxu0 0.0
    %174 = vmatpush1.msra.mxu0 0.0
    %175 = vmatprep.subr.mxu0 0.0
    %176 = vmatpush1.msra.mxu0 0.0
    %177 = vmatprep.subr.mxu0 0.0
    %178 = vmatpush1.msra.mxu0 0.0
    %179 = vmatprep.subr.mxu0 0.0
    %180 = vmatpush1.msra.mxu0 0.0
    %181 = vmatprep.subr.mxu0 0.0
    %182 = vmatpush1.msra.mxu0 0.0
    %183 = vmatprep.subr.mxu0 0.0
    %184 = vmatpush1.msra.mxu0 0.0
    %185 = vmatprep.subr.mxu0 0.0
    %186 = vmatpush1.msra.mxu0 0.0
    %187 = vmatprep.subr.mxu0 0.0
    %188 = vmatpush1.msra.mxu0 0.0
    %189 = vmatprep.subr.mxu0 0.0
    %190 = vmatpush1.msra.mxu0 0.0
    %191 = vmatprep.subr.mxu0 0.0
    %192 = vmatpush1.msra.mxu0 0.0
    %193 = vmatprep.subr.mxu0 0.0
    %194 = vmatpush1.msra.mxu0 0.0
    %195 = vmatprep.subr.mxu0 0.0
    %196 = vmatpush1.msra.mxu0 0.0
    %197 = vmatprep.subr.mxu0 0.0
    %198 = vmatpush1.msra.mxu0 0.0
    %199 = vmatprep.subr.mxu0 0.0
    %200 = vmatpush1.msra.mxu0 0.0
    %201 = vmatprep.subr.mxu0 0.0
    %202 = vmatpush1.msra.mxu0 0.0
    %203 = vmatprep.subr.mxu0 0.0
    %204 = vmatpush1.msra.mxu0 0.0
    %205 = vmatprep.subr.mxu0 0.0
    %206 = vmatpush1.msra.mxu0 0.0
    %207 = vmatprep.subr.mxu0 0.0
    %208 = vmatpush1.msra.mxu0 0.0
    %209 = vmatprep.subr.mxu0 0.0
    %210 = vmatpush1.msra.mxu0 0.0
    %211 = vmatprep.subr.mxu0 0.0
    %212 = vmatpush1.msra.mxu0 0.0
    %213 = vmatprep.subr.mxu0 0.0
    %214 = vmatpush1.msra.mxu0 0.0
    %215 = vmatprep.subr.mxu0 0.0
    %216 = vmatpush1.msra.mxu0 0.0
    %217 = vmatprep.subr.mxu0 0.0
    %218 = vmatpush1.msra.mxu0 0.0
    %219 = vmatprep.subr.mxu0 0.0
    %220 = vmatpush1.msra.mxu0 0.0
    %221 = vmatprep.subr.mxu0 0.0
    %222 = vmatpush1.msra.mxu0 0.0
    %223 = vmatprep.subr.mxu0 0.0
    %224 = vmatpush1.msra.mxu0 0.0
    %225 = vmatprep.mubr.f32.mxu0 0.0
    %226 = vmatmul.mubr.f32.gmra.mrb[0].mxu0 %v159
    %v227 = vpop.f32.mrb[0].mxu0
    %v228 = vadd.f32 0.0, %v227
    %v229 = vpop.f32.mrb[0].mxu0
    %230 = vdwg.mxu0
    %v231 = vld [vmem:[%s1] sm:$0x3]
    %v232 = vld [vmem:[#allocation2] sm:$0x3]
    %vm233 = vcmask 261120
    %v235 = vsel %vm233, %v231, 0
    %237 = vmatprep.subr.mxu0 0.0
    %238 = vmatpush1.msra.mxu0 %v75
    %239 = vmatprep.subr.mxu0 0.0
    %240 = vmatpush1.msra.mxu0 %v76
    %241 = vmatprep.subr.mxu0 0.0
    %242 = vmatpush1.msra.mxu0 %v77
    %243 = vmatprep.subr.mxu0 0.0
    %244 = vmatpush1.msra.mxu0 %v78
    %245 = vmatprep.subr.mxu0 0.0
    %246 = vmatpush1.msra.mxu0 0.0
    %247 = vmatprep.subr.mxu0 0.0
    %248 = vmatpush1.msra.mxu0 0.0
    %249 = vmatprep.subr.mxu0 0.0
    %250 = vmatpush1.msra.mxu0 0.0
    %251 = vmatprep.subr.mxu0 0.0
    %252 = vmatpush1.msra.mxu0 0.0
    %253 = vmatprep.subr.mxu0 0.0
    %254 = vmatpush1.msra.mxu0 0.0
    %255 = vmatprep.subr.mxu0 0.0
    %256 = vmatpush1.msra.mxu0 0.0
    %257 = vmatprep.subr.mxu0 0.0
    %258 = vmatpush1.msra.mxu0 0.0
    %259 = vmatprep.subr.mxu0 0.0
    %260 = vmatpush1.msra.mxu0 0.0
    %261 = vmatprep.subr.mxu0 0.0
    %262 = vmatpush1.msra.mxu0 0.0
    %263 = vmatprep.subr.mxu0 0.0
    %264 = vmatpush1.msra.mxu0 0.0
    %265 = vmatprep.subr.mxu0 0.0
    %266 = vmatpush1.msra.mxu0 0.0
    %267 = vmatprep.subr.mxu0 0.0
    %268 = vmatpush1.msra.mxu0 0.0
    %269 = vmatprep.subr.mxu0 0.0
    %270 = vmatpush1.msra.mxu0 0.0
    %271 = vmatprep.subr.mxu0 0.0
    %272 = vmatpush1.msra.mxu0 0.0
    %273 = vmatprep.subr.mxu0 0.0
    %274 = vmatpush1.msra.mxu0 0.0
    %275 = vmatprep.subr.mxu0 0.0
    %276 = vmatpush1.msra.mxu0 0.0
    %277 = vmatprep.subr.mxu0 0.0
    %278 = vmatpush1.msra.mxu0 0.0
    %279 = vmatprep.subr.mxu0 0.0
    %280 = vmatpush1.msra.mxu0 0.0
    %281 = vmatprep.subr.mxu0 0.0
    %282 = vmatpush1.msra.mxu0 0.0
    %283 = vmatprep.subr.mxu0 0.0
    %284 = vmatpush1.msra.mxu0 0.0
    %285 = vmatprep.subr.mxu0 0.0
    %286 = vmatpush1.msra.mxu0 0.0
    %287 = vmatprep.subr.mxu0 0.0
    %288 = vmatpush1.msra.mxu0 0.0
    %289 = vmatprep.subr.mxu0 0.0
    %290 = vmatpush1.msra.mxu0 0.0
    %291 = vmatprep.subr.mxu0 0.0
    %292 = vmatpush1.msra.mxu0 0.0
    %293 = vmatprep.subr.mxu0 0.0
    %294 = vmatpush1.msra.mxu0 0.0
    %295 = vmatprep.subr.mxu0 0.0
    %296 = vmatpush1.msra.mxu0 0.0
    %297 = vmatprep.subr.mxu0 0.0
    %298 = vmatpush1.msra.mxu0 0.0
    %299 = vmatprep.subr.mxu0 0.0
    %300 = vmatpush1.msra.mxu0 0.0
    %301 = vmatprep.mubr.f32.mxu0 0.0
    %302 = vmatmul.mubr.f32.gmra.mrb[0].mxu0 %v235
    %v303 = vpop.f32.mrb[0].mxu0
    %v304 = vadd.f32 0.0, %v303
    %v305 = vpop.f32.mrb[0].mxu0
    %306 = vdwg.mxu0
    %v308 = vrot.slane %v304, 1
    %v311 = vadd.f32 %v155, %v304
    %v312 = vadd.f32 %v228, %v308
    %v314 = vlaneseq
    %v315 = vshrl.u32 %v314, 7
    %v316 = vsub.s32 0, %v315
    %v317 = vrot.slane %v79, %v316
    %v319 = vadd.f32 %v311, %v317
    %v320 = vadd.f32 %v312, %v317
    %v321 = vxor.u32 %v319, 2147483648
    %v322 = vxor.u32 %v320, 2147483648
    %v323 = vmul.f32 %v321, 1.442695
    %v324 = vpow.pop %v323
    %v325 = vmul.f32 %v322, 1.442695
    %v326 = vpow.pop %v325
    %v327 = vadd.f32 %v324, 1.0
    %v328 = vadd.f32 %v326, 1.0
    %v329 = vrcp.pop %v327
    %v330 = vmul.f32 1.0, %v329
    %v331 = vrcp.pop %v328
    %v332 = vmul.f32 1.0, %v331
    %v333 = vtanh.pop %v319
    %v334 = vtanh.pop %v320
    %v336 = vrot.slane %v232, 1
    %337 = vrot.lane.b32.xlu0 %v232, 32
    %v338 = vpop.permute.xlu0 %337
    %339 = vrot.lane.b32.xlu0 %v336, 32
    %v340 = vpop.permute.xlu0 %339
    %v343 = vmul.f32 %v330, %v338
    %v344 = vmul.f32 %v332, %v340
    %347 = vrot.lane.b32.xlu0 %v333, 32
    %v348 = vpop.permute.xlu0 %347
    %349 = vrot.lane.b32.xlu0 %v334, 32
    %v350 = vpop.permute.xlu0 %349
    %v353 = vmul.f32 %v330, %v348
    %v354 = vmul.f32 %v332, %v350
    %357 = vrot.lane.b32.xlu0 %v353, 32
    %v358 = vpop.permute.xlu0 %357
    %359 = vrot.lane.b32.xlu0 %v354, 32
    %v360 = vpop.permute.xlu0 %359
    %v363 = vadd.f32 %v343, %v358
    %v364 = vadd.f32 %v344, %v360
    %v365 = vtanh.pop %v363
    %v366 = vtanh.pop %v364
    %369 = vrot.lane.b32.xlu0 %v365, 32
    %v370 = vpop.permute.xlu0 %369
    %371 = vrot.lane.b32.xlu0 %v366, 32
    %v372 = vpop.permute.xlu0 %371
    %v375 = vmul.f32 %v330, %v370
    %v376 = vmul.f32 %v332, %v372
    %v379 = vrot.slane %v376, 7
    %vm380 = vcmask 1041409
    %v381 = vsel %vm380, %v379, %v375
    %382 = vrot.lane.b32.xlu0 %v381, 64
    %v383 = vpop.permute.xlu0 %382
    %v384 = vsel %vm233, %v383, 0
    %386 = vmatprep.subr.mxu0 0.0
    %387 = vmatpush1.msra.mxu0 %v75
    %388 = vmatprep.subr.mxu0 0.0
    %389 = vmatpush1.msra.mxu0 %v76
    %390 = vmatprep.subr.mxu0 0.0
    %391 = vmatpush1.msra.mxu0 %v77
    %392 = vmatprep.subr.mxu0 0.0
    %393 = vmatpush1.msra.mxu0 %v78
    %394 = vmatprep.subr.mxu0 0.0
    %395 = vmatpush1.msra.mxu0 0.0
    %396 = vmatprep.subr.mxu0 0.0
    %397 = vmatpush1.msra.mxu0 0.0
    %398 = vmatprep.subr.mxu0 0.0
    %399 = vmatpush1.msra.mxu0 0.0
    %400 = vmatprep.subr.mxu0 0.0
    %401 = vmatpush1.msra.mxu0 0.0
    %402 = vmatprep.subr.mxu0 0.0
    %403 = vmatpush1.msra.mxu0 0.0
    %404 = vmatprep.subr.mxu0 0.0
    %405 = vmatpush1.msra.mxu0 0.0
    %406 = vmatprep.subr.mxu0 0.0
    %407 = vmatpush1.msra.mxu0 0.0
    %408 = vmatprep.subr.mxu0 0.0
    %409 = vmatpush1.msra.mxu0 0.0
    %410 = vmatprep.subr.mxu0 0.0
    %411 = vmatpush1.msra.mxu0 0.0
    %412 = vmatprep.subr.mxu0 0.0
    %413 = vmatpush1.msra.mxu0 0.0
    %414 = vmatprep.subr.mxu0 0.0
    %415 = vmatpush1.msra.mxu0 0.0
    %416 = vmatprep.subr.mxu0 0.0
    %417 = vmatpush1.msra.mxu0 0.0
    %418 = vmatprep.subr.mxu0 0.0
    %419 = vmatpush1.msra.mxu0 0.0
    %420 = vmatprep.subr.mxu0 0.0
    %421 = vmatpush1.msra.mxu0 0.0
    %422 = vmatprep.subr.mxu0 0.0
    %423 = vmatpush1.msra.mxu0 0.0
    %424 = vmatprep.subr.mxu0 0.0
    %425 = vmatpush1.msra.mxu0 0.0
    %426 = vmatprep.subr.mxu0 0.0
    %427 = vmatpush1.msra.mxu0 0.0
    %428 = vmatprep.subr.mxu0 0.0
    %429 = vmatpush1.msra.mxu0 0.0
    %430 = vmatprep.subr.mxu0 0.0
    %431 = vmatpush1.msra.mxu0 0.0
    %432 = vmatprep.subr.mxu0 0.0
    %433 = vmatpush1.msra.mxu0 0.0
    %434 = vmatprep.subr.mxu0 0.0
    %435 = vmatpush1.msra.mxu0 0.0
    %436 = vmatprep.subr.mxu0 0.0
    %437 = vmatpush1.msra.mxu0 0.0
    %438 = vmatprep.subr.mxu0 0.0
    %439 = vmatpush1.msra.mxu0 0.0
    %440 = vmatprep.subr.mxu0 0.0
    %441 = vmatpush1.msra.mxu0 0.0
    %442 = vmatprep.subr.mxu0 0.0
    %443 = vmatpush1.msra.mxu0 0.0
    %444 = vmatprep.subr.mxu0 0.0
    %445 = vmatpush1.msra.mxu0 0.0
    %446 = vmatprep.subr.mxu0 0.0
    %447 = vmatpush1.msra.mxu0 0.0
    %448 = vmatprep.subr.mxu0 0.0
    %449 = vmatpush1.msra.mxu0 0.0
    %450 = vmatprep.mubr.f32.mxu0 0.0
    %451 = vmatmul.mubr.f32.gmra.mrb[0].mxu0 %v384
    %v452 = vpop.f32.mrb[0].mxu0
    %v453 = vadd.f32 0.0, %v452
    %v454 = vpop.f32.mrb[0].mxu0
    %455 = vdwg.mxu0
    %v457 = vrot.slane %v453, 7
    %v460 = vadd.f32 %v155, %v457
    %v461 = vadd.f32 %v228, %v453
    %v462 = vadd.f32 %v460, %v317
    %v463 = vadd.f32 %v461, %v317
    %v464 = vxor.u32 %v462, 2147483648
    %v465 = vxor.u32 %v463, 2147483648
    %v466 = vmul.f32 %v464, 1.442695
    %v467 = vpow.pop %v466
    %v468 = vmul.f32 %v465, 1.442695
    %v469 = vpow.pop %v468
    %v470 = vadd.f32 %v467, 1.0
    %v471 = vadd.f32 %v469, 1.0
    %v472 = vrcp.pop %v470
    %v473 = vmul.f32 1.0, %v472
    %v474 = vrcp.pop %v471
    %v475 = vmul.f32 1.0, %v474
    %v476 = vtanh.pop %v462
    %v477 = vtanh.pop %v463
    %v480 = vrot.slane %v363, 7
    %v481 = vrot.slane %v364, 7
    %v484 = vmul.f32 %v473, %v480
    %v485 = vmul.f32 %v475, %v481
    %488 = vrot.lane.b32.xlu0 %v476, 32
    %v489 = vpop.permute.xlu0 %488
    %490 = vrot.lane.b32.xlu0 %v477, 32
    %v491 = vpop.permute.xlu0 %490
    %v494 = vmul.f32 %v473, %v489
    %v495 = vmul.f32 %v475, %v491
    %498 = vrot.lane.b32.xlu0 %v494, 32
    %v499 = vpop.permute.xlu0 %498
    %500 = vrot.lane.b32.xlu0 %v495, 32
    %v501 = vpop.permute.xlu0 %500
    %v504 = vadd.f32 %v484, %v499
    %v505 = vadd.f32 %v485, %v501
    %v506 = vtanh.pop %v504
    %v507 = vtanh.pop %v505
    %510 = vrot.lane.b32.xlu0 %v506, 32
    %v511 = vpop.permute.xlu0 %510
    %512 = vrot.lane.b32.xlu0 %v507, 32
    %v513 = vpop.permute.xlu0 %512
    %v516 = vmul.f32 %v473, %v511
    %v517 = vmul.f32 %v475, %v513
    %v520 = vrot.slane %v516, 1
    %v521 = vsel %vm380, %v517, %v520
    %522 = vrot.lane.b32.xlu0 %v521, 64
    %v523 = vpop.permute.xlu0 %522
    %v524 = vsel %vm233, %v523, 0
    %526 = vmatprep.subr.mxu0 0.0
    %527 = vmatpush1.msra.mxu0 %v75
    %528 = vmatprep.subr.mxu0 0.0
    %529 = vmatpush1.msra.mxu0 %v76
    %530 = vmatprep.subr.mxu0 0.0
    %531 = vmatpush1.msra.mxu0 %v77
    %532 = vmatprep.subr.mxu0 0.0
    %533 = vmatpush1.msra.mxu0 %v78
    %534 = vmatprep.subr.mxu0 0.0
    %535 = vmatpush1.msra.mxu0 0.0
    %536 = vmatprep.subr.mxu0 0.0
    %537 = vmatpush1.msra.mxu0 0.0
    %538 = vmatprep.subr.mxu0 0.0
    %539 = vmatpush1.msra.mxu0 0.0
    %540 = vmatprep.subr.mxu0 0.0
    %541 = vmatpush1.msra.mxu0 0.0
    %542 = vmatprep.subr.mxu0 0.0
    %543 = vmatpush1.msra.mxu0 0.0
    %544 = vmatprep.subr.mxu0 0.0
    %545 = vmatpush1.msra.mxu0 0.0
    %546 = vmatprep.subr.mxu0 0.0
    %547 = vmatpush1.msra.mxu0 0.0
    %548 = vmatprep.subr.mxu0 0.0
    %549 = vmatpush1.msra.mxu0 0.0
    %550 = vmatprep.subr.mxu0 0.0
    %551 = vmatpush1.msra.mxu0 0.0
    %552 = vmatprep.subr.mxu0 0.0
    %553 = vmatpush1.msra.mxu0 0.0
    %554 = vmatprep.subr.mxu0 0.0
    %555 = vmatpush1.msra.mxu0 0.0
    %556 = vmatprep.subr.mxu0 0.0
    %557 = vmatpush1.msra.mxu0 0.0
    %558 = vmatprep.subr.mxu0 0.0
    %559 = vmatpush1.msra.mxu0 0.0
    %560 = vmatprep.subr.mxu0 0.0
    %561 = vmatpush1.msra.mxu0 0.0
    %562 = vmatprep.subr.mxu0 0.0
    %563 = vmatpush1.msra.mxu0 0.0
    %564 = vmatprep.subr.mxu0 0.0
    %565 = vmatpush1.msra.mxu0 0.0
    %566 = vmatprep.subr.mxu0 0.0
    %567 = vmatpush1.msra.mxu0 0.0
    %568 = vmatprep.subr.mxu0 0.0
    %569 = vmatpush1.msra.mxu0 0.0
    %570 = vmatprep.subr.mxu0 0.0
    %571 = vmatpush1.msra.mxu0 0.0
    %572 = vmatprep.subr.mxu0 0.0
    %573 = vmatpush1.msra.mxu0 0.0
    %574 = vmatprep.subr.mxu0 0.0
    %575 = vmatpush1.msra.mxu0 0.0
    %576 = vmatprep.subr.mxu0 0.0
    %577 = vmatpush1.msra.mxu0 0.0
    %578 = vmatprep.subr.mxu0 0.0
    %579 = vmatpush1.msra.mxu0 0.0
    %580 = vmatprep.subr.mxu0 0.0
    %581 = vmatpush1.msra.mxu0 0.0
    %582 = vmatprep.subr.mxu0 0.0
    %583 = vmatpush1.msra.mxu0 0.0
    %584 = vmatprep.subr.mxu0 0.0
    %585 = vmatpush1.msra.mxu0 0.0
    %586 = vmatprep.subr.mxu0 0.0
    %587 = vmatpush1.msra.mxu0 0.0
    %588 = vmatprep.subr.mxu0 0.0
    %589 = vmatpush1.msra.mxu0 0.0
    %590 = vmatprep.mubr.f32.mxu0 0.0
    %591 = vmatmul.mubr.f32.gmra.mrb[0].mxu0 %v524
    %v592 = vpop.f32.mrb[0].mxu0
    %v593 = vadd.f32 0.0, %v592
    %v594 = vpop.f32.mrb[0].mxu0
    %595 = vdwg.mxu0
    %v597 = vrot.slane %v593, 6
    %v598 = vrot.slane %v593, 7
    %v601 = vadd.f32 %v155, %v597
    %v602 = vadd.f32 %v228, %v598
    %v603 = vadd.f32 %v601, %v317
    %v604 = vadd.f32 %v602, %v317
    %v605 = vxor.u32 %v603, 2147483648
    %v606 = vxor.u32 %v604, 2147483648
    %v607 = vmul.f32 %v605, 1.442695
    %v608 = vpow.pop %v607
    %v609 = vmul.f32 %v606, 1.442695
    %v610 = vpow.pop %v609
    %v611 = vadd.f32 %v608, 1.0
    %v612 = vadd.f32 %v610, 1.0
    %v613 = vrcp.pop %v611
    %v614 = vmul.f32 1.0, %v613
    %v615 = vrcp.pop %v612
    %v616 = vmul.f32 1.0, %v615
    %v617 = vtanh.pop %v603
    %v618 = vtanh.pop %v604
    %v621 = vrot.slane %v504, 7
    %v622 = vrot.slane %v505, 7
    %v625 = vmul.f32 %v614, %v621
    %v626 = vmul.f32 %v616, %v622
    %629 = vrot.lane.b32.xlu0 %v617, 32
    %v630 = vpop.permute.xlu0 %629
    %631 = vrot.lane.b32.xlu0 %v618, 32
    %v632 = vpop.permute.xlu0 %631
    %v635 = vmul.f32 %v614, %v630
    %v636 = vmul.f32 %v616, %v632
    %639 = vrot.lane.b32.xlu0 %v635, 32
    %v640 = vpop.permute.xlu0 %639
    %641 = vrot.lane.b32.xlu0 %v636, 32
    %v642 = vpop.permute.xlu0 %641
    %v645 = vadd.f32 %v625, %v640
    %v646 = vadd.f32 %v626, %v642
    %v647 = vtanh.pop %v645
    %v648 = vtanh.pop %v646
    %651 = vrot.lane.b32.xlu0 %v647, 32
    %v652 = vpop.permute.xlu0 %651
    %653 = vrot.lane.b32.xlu0 %v648, 32
    %v654 = vpop.permute.xlu0 %653
    %v657 = vmul.f32 %v614, %v652
    %v658 = vmul.f32 %v616, %v654
    %v661 = vrot.slane %v657, 2
    %v662 = vrot.slane %v658, 1
    %v663 = vsel %vm380, %v662, %v661
    %664 = vrot.lane.b32.xlu0 %v663, 64
    %v665 = vpop.permute.xlu0 %664
    %v666 = vsel %vm233, %v665, 0
    %668 = vmatprep.subr.mxu0 0.0
    %669 = vmatpush1.msra.mxu0 %v75
    %670 = vmatprep.subr.mxu0 0.0
    %671 = vmatpush1.msra.mxu0 %v76
    %672 = vmatprep.subr.mxu0 0.0
    %673 = vmatpush1.msra.mxu0 %v77
    %674 = vmatprep.subr.mxu0 0.0
    %675 = vmatpush1.msra.mxu0 %v78
    %676 = vmatprep.subr.mxu0 0.0
    %677 = vmatpush1.msra.mxu0 0.0
    %678 = vmatprep.subr.mxu0 0.0
    %679 = vmatpush1.msra.mxu0 0.0
    %680 = vmatprep.subr.mxu0 0.0
    %681 = vmatpush1.msra.mxu0 0.0
    %682 = vmatprep.subr.mxu0 0.0
    %683 = vmatpush1.msra.mxu0 0.0
    %684 = vmatprep.subr.mxu0 0.0
    %685 = vmatpush1.msra.mxu0 0.0
    %686 = vmatprep.subr.mxu0 0.0
    %687 = vmatpush1.msra.mxu0 0.0
    %688 = vmatprep.subr.mxu0 0.0
    %689 = vmatpush1.msra.mxu0 0.0
    %690 = vmatprep.subr.mxu0 0.0
    %691 = vmatpush1.msra.mxu0 0.0
    %692 = vmatprep.subr.mxu0 0.0
    %693 = vmatpush1.msra.mxu0 0.0
    %694 = vmatprep.subr.mxu0 0.0
    %695 = vmatpush1.msra.mxu0 0.0
    %696 = vmatprep.subr.mxu0 0.0
    %697 = vmatpush1.msra.mxu0 0.0
    %698 = vmatprep.subr.mxu0 0.0
    %699 = vmatpush1.msra.mxu0 0.0
    %700 = vmatprep.subr.mxu0 0.0
    %701 = vmatpush1.msra.mxu0 0.0
    %702 = vmatprep.subr.mxu0 0.0
    %703 = vmatpush1.msra.mxu0 0.0
    %704 = vmatprep.subr.mxu0 0.0
    %705 = vmatpush1.msra.mxu0 0.0
    %706 = vmatprep.subr.mxu0 0.0
    %707 = vmatpush1.msra.mxu0 0.0
    %708 = vmatprep.subr.mxu0 0.0
    %709 = vmatpush1.msra.mxu0 0.0
    %710 = vmatprep.subr.mxu0 0.0
    %711 = vmatpush1.msra.mxu0 0.0
    %712 = vmatprep.subr.mxu0 0.0
    %713 = vmatpush1.msra.mxu0 0.0
    %714 = vmatprep.subr.mxu0 0.0
    %715 = vmatpush1.msra.mxu0 0.0
    %716 = vmatprep.subr.mxu0 0.0
    %717 = vmatpush1.msra.mxu0 0.0
    %718 = vmatprep.subr.mxu0 0.0
    %719 = vmatpush1.msra.mxu0 0.0
    %720 = vmatprep.subr.mxu0 0.0
    %721 = vmatpush1.msra.mxu0 0.0
    %722 = vmatprep.subr.mxu0 0.0
    %723 = vmatpush1.msra.mxu0 0.0
    %724 = vmatprep.subr.mxu0 0.0
    %725 = vmatpush1.msra.mxu0 0.0
    %726 = vmatprep.subr.mxu0 0.0
    %727 = vmatpush1.msra.mxu0 0.0
    %728 = vmatprep.subr.mxu0 0.0
    %729 = vmatpush1.msra.mxu0 0.0
    %730 = vmatprep.subr.mxu0 0.0
    %731 = vmatpush1.msra.mxu0 0.0
    %732 = vmatprep.mubr.f32.mxu0 0.0
    %733 = vmatmul.mubr.f32.gmra.mrb[0].mxu0 %v666
    %v734 = vpop.f32.mrb[0].mxu0
    %v735 = vadd.f32 0.0, %v734
    %v736 = vpop.f32.mrb[0].mxu0
    %737 = vdwg.mxu0
    %v739 = vrot.slane %v735, 5
    %v740 = vrot.slane %v735, 6
    %v743 = vadd.f32 %v155, %v739
    %v744 = vadd.f32 %v228, %v740
    %v745 = vadd.f32 %v743, %v317
    %v746 = vadd.f32 %v744, %v317
    %v747 = vxor.u32 %v745, 2147483648
    %v748 = vxor.u32 %v746, 2147483648
    %v749 = vmul.f32 %v747, 1.442695
    %v750 = vpow.pop %v749
    %v751 = vmul.f32 %v748, 1.442695
    %v752 = vpow.pop %v751
    %v753 = vadd.f32 %v750, 1.0
    %v754 = vadd.f32 %v752, 1.0
    %v755 = vrcp.pop %v753
    %v756 = vmul.f32 1.0, %v755
    %v757 = vrcp.pop %v754
    %v758 = vmul.f32 1.0, %v757
    %v759 = vtanh.pop %v745
    %v760 = vtanh.pop %v746
    %v763 = vrot.slane %v645, 7
    %v764 = vrot.slane %v646, 7
    %v767 = vmul.f32 %v756, %v763
    %v768 = vmul.f32 %v758, %v764
    %771 = vrot.lane.b32.xlu0 %v759, 32
    %v772 = vpop.permute.xlu0 %771
    %773 = vrot.lane.b32.xlu0 %v760, 32
    %v774 = vpop.permute.xlu0 %773
    %v777 = vmul.f32 %v756, %v772
    %v778 = vmul.f32 %v758, %v774
    %781 = vrot.lane.b32.xlu0 %v777, 32
    %v782 = vpop.permute.xlu0 %781
    %783 = vrot.lane.b32.xlu0 %v778, 32
    %v784 = vpop.permute.xlu0 %783
    %v787 = vadd.f32 %v767, %v782
    %v788 = vadd.f32 %v768, %v784
    %v789 = vtanh.pop %v787
    %v790 = vtanh.pop %v788
    %793 = vrot.lane.b32.xlu0 %v789, 32
    %v794 = vpop.permute.xlu0 %793
    %795 = vrot.lane.b32.xlu0 %v790, 32
    %v796 = vpop.permute.xlu0 %795
    %v799 = vmul.f32 %v756, %v794
    %v800 = vmul.f32 %v758, %v796
    %v803 = vrot.slane %v799, 3
    %v804 = vrot.slane %v800, 2
    %v805 = vsel %vm380, %v804, %v803
    %806 = vrot.lane.b32.xlu0 %v805, 64
    %v807 = vpop.permute.xlu0 %806
    %v808 = vsel %vm233, %v807, 0
    %810 = vmatprep.subr.mxu0 0.0
    %811 = vmatpush1.msra.mxu0 %v75
    %812 = vmatprep.subr.mxu0 0.0
    %813 = vmatpush1.msra.mxu0 %v76
    %814 = vmatprep.subr.mxu0 0.0
    %815 = vmatpush1.msra.mxu0 %v77
    %816 = vmatprep.subr.mxu0 0.0
    %817 = vmatpush1.msra.mxu0 %v78
    %818 = vmatprep.subr.mxu0 0.0
    %819 = vmatpush1.msra.mxu0 0.0
    %820 = vmatprep.subr.mxu0 0.0
    %821 = vmatpush1.msra.mxu0 0.0
    %822 = vmatprep.subr.mxu0 0.0
    %823 = vmatpush1.msra.mxu0 0.0
    %824 = vmatprep.subr.mxu0 0.0
    %825 = vmatpush1.msra.mxu0 0.0
    %826 = vmatprep.subr.mxu0 0.0
    %827 = vmatpush1.msra.mxu0 0.0
    %828 = vmatprep.subr.mxu0 0.0
    %829 = vmatpush1.msra.mxu0 0.0
    %830 = vmatprep.subr.mxu0 0.0
    %831 = vmatpush1.msra.mxu0 0.0
    %832 = vmatprep.subr.mxu0 0.0
    %833 = vmatpush1.msra.mxu0 0.0
    %834 = vmatprep.subr.mxu0 0.0
    %835 = vmatpush1.msra.mxu0 0.0
    %836 = vmatprep.subr.mxu0 0.0
    %837 = vmatpush1.msra.mxu0 0.0
    %838 = vmatprep.subr.mxu0 0.0
    %839 = vmatpush1.msra.mxu0 0.0
    %840 = vmatprep.subr.mxu0 0.0
    %841 = vmatpush1.msra.mxu0 0.0
    %842 = vmatprep.subr.mxu0 0.0
    %843 = vmatpush1.msra.mxu0 0.0
    %844 = vmatprep.subr.mxu0 0.0
    %845 = vmatpush1.msra.mxu0 0.0
    %846 = vmatprep.subr.mxu0 0.0
    %847 = vmatpush1.msra.mxu0 0.0
    %848 = vmatprep.subr.mxu0 0.0
    %849 = vmatpush1.msra.mxu0 0.0
    %850 = vmatprep.subr.mxu0 0.0
    %851 = vmatpush1.msra.mxu0 0.0
    %852 = vmatprep.subr.mxu0 0.0
    %853 = vmatpush1.msra.mxu0 0.0
    %854 = vmatprep.subr.mxu0 0.0
    %855 = vmatpush1.msra.mxu0 0.0
    %856 = vmatprep.subr.mxu0 0.0
    %857 = vmatpush1.msra.mxu0 0.0
    %858 = vmatprep.subr.mxu0 0.0
    %859 = vmatpush1.msra.mxu0 0.0
    %860 = vmatprep.subr.mxu0 0.0
    %861 = vmatpush1.msra.mxu0 0.0
    %862 = vmatprep.subr.mxu0 0.0
    %863 = vmatpush1.msra.mxu0 0.0
    %864 = vmatprep.subr.mxu0 0.0
    %865 = vmatpush1.msra.mxu0 0.0
    %866 = vmatprep.subr.mxu0 0.0
    %867 = vmatpush1.msra.mxu0 0.0
    %868 = vmatprep.subr.mxu0 0.0
    %869 = vmatpush1.msra.mxu0 0.0
    %870 = vmatprep.subr.mxu0 0.0
    %871 = vmatpush1.msra.mxu0 0.0
    %872 = vmatprep.subr.mxu0 0.0
    %873 = vmatpush1.msra.mxu0 0.0
    %874 = vmatprep.mubr.f32.mxu0 0.0
    %875 = vmatmul.mubr.f32.gmra.mrb[0].mxu0 %v808
    %v876 = vpop.f32.mrb[0].mxu0
    %v877 = vadd.f32 0.0, %v876
    %v878 = vpop.f32.mrb[0].mxu0
    %879 = vdwg.mxu0
    %v881 = vrot.slane %v877, 4
    %v882 = vrot.slane %v877, 5
    %v885 = vadd.f32 %v155, %v881
    %v886 = vadd.f32 %v228, %v882
    %v887 = vadd.f32 %v885, %v317
    %v888 = vadd.f32 %v886, %v317
    %v889 = vxor.u32 %v887, 2147483648
    %v890 = vxor.u32 %v888, 2147483648
    %v891 = vmul.f32 %v889, 1.442695
    %v892 = vpow.pop %v891
    %v893 = vmul.f32 %v890, 1.442695
    %v894 = vpow.pop %v893
    %v895 = vadd.f32 %v892, 1.0
    %v896 = vadd.f32 %v894, 1.0
    %v897 = vrcp.pop %v895
    %v898 = vmul.f32 1.0, %v897
    %v899 = vrcp.pop %v896
    %v900 = vmul.f32 1.0, %v899
    %v901 = vtanh.pop %v887
    %v902 = vtanh.pop %v888
    %v905 = vrot.slane %v787, 7
    %v906 = vrot.slane %v788, 7
    %v909 = vmul.f32 %v898, %v905
    %v910 = vmul.f32 %v900, %v906
    %913 = vrot.lane.b32.xlu0 %v901, 32
    %v914 = vpop.permute.xlu0 %913
    %915 = vrot.lane.b32.xlu0 %v902, 32
    %v916 = vpop.permute.xlu0 %915
    %v919 = vmul.f32 %v898, %v914
    %v920 = vmul.f32 %v900, %v916
    %923 = vrot.lane.b32.xlu0 %v919, 32
    %v924 = vpop.permute.xlu0 %923
    %925 = vrot.lane.b32.xlu0 %v920, 32
    %v926 = vpop.permute.xlu0 %925
    %v929 = vadd.f32 %v909, %v924
    %v930 = vadd.f32 %v910, %v926
    %v931 = vtanh.pop %v929
    %v932 = vtanh.pop %v930
    %935 = vrot.lane.b32.xlu0 %v931, 32
    %v936 = vpop.permute.xlu0 %935
    %937 = vrot.lane.b32.xlu0 %v932, 32
    %v938 = vpop.permute.xlu0 %937
    %v941 = vmul.f32 %v898, %v936
    %v942 = vmul.f32 %v900, %v938
    %v945 = vrot.slane %v941, 4
    %v946 = vrot.slane %v942, 3
    %v947 = vsel %vm380, %v946, %v945
    %948 = vrot.lane.b32.xlu0 %v947, 64
    %v949 = vpop.permute.xlu0 %948
    %v950 = vsel %vm233, %v949, 0
    %952 = vmatprep.subr.mxu0 0.0
    %953 = vmatpush1.msra.mxu0 %v75
    %954 = vmatprep.subr.mxu0 0.0
    %955 = vmatpush1.msra.mxu0 %v76
    %956 = vmatprep.subr.mxu0 0.0
    %957 = vmatpush1.msra.mxu0 %v77
    %958 = vmatprep.subr.mxu0 0.0
    %959 = vmatpush1.msra.mxu0 %v78
    %960 = vmatprep.subr.mxu0 0.0
    %961 = vmatpush1.msra.mxu0 0.0
    %962 = vmatprep.subr.mxu0 0.0
    %963 = vmatpush1.msra.mxu0 0.0
    %964 = vmatprep.subr.mxu0 0.0
    %965 = vmatpush1.msra.mxu0 0.0
    %966 = vmatprep.subr.mxu0 0.0
    %967 = vmatpush1.msra.mxu0 0.0
    %968 = vmatprep.subr.mxu0 0.0
    %969 = vmatpush1.msra.mxu0 0.0
    %970 = vmatprep.subr.mxu0 0.0
    %971 = vmatpush1.msra.mxu0 0.0
    %972 = vmatprep.subr.mxu0 0.0
    %973 = vmatpush1.msra.mxu0 0.0
    %974 = vmatprep.subr.mxu0 0.0
    %975 = vmatpush1.msra.mxu0 0.0
    %976 = vmatprep.subr.mxu0 0.0
    %977 = vmatpush1.msra.mxu0 0.0
    %978 = vmatprep.subr.mxu0 0.0
    %979 = vmatpush1.msra.mxu0 0.0
    %980 = vmatprep.subr.mxu0 0.0
    %981 = vmatpush1.msra.mxu0 0.0
    %982 = vmatprep.subr.mxu0 0.0
    %983 = vmatpush1.msra.mxu0 0.0
    %984 = vmatprep.subr.mxu0 0.0
    %985 = vmatpush1.msra.mxu0 0.0
    %986 = vmatprep.subr.mxu0 0.0
    %987 = vmatpush1.msra.mxu0 0.0
    %988 = vmatprep.subr.mxu0 0.0
    %989 = vmatpush1.msra.mxu0 0.0
    %990 = vmatprep.subr.mxu0 0.0
    %991 = vmatpush1.msra.mxu0 0.0
    %992 = vmatprep.subr.mxu0 0.0
    %993 = vmatpush1.msra.mxu0 0.0
    %994 = vmatprep.subr.mxu0 0.0
    %995 = vmatpush1.msra.mxu0 0.0
    %996 = vmatprep.subr.mxu0 0.0
    %997 = vmatpush1.msra.mxu0 0.0
    %998 = vmatprep.subr.mxu0 0.0
    %999 = vmatpush1.msra.mxu0 0.0
    %1000 = vmatprep.subr.mxu0 0.0
    %1001 = vmatpush1.msra.mxu0 0.0
    %1002 = vmatprep.subr.mxu0 0.0
    %1003 = vmatpush1.msra.mxu0 0.0
    %1004 = vmatprep.subr.mxu0 0.0
    %1005 = vmatpush1.msra.mxu0 0.0
    %1006 = vmatprep.subr.mxu0 0.0
    %1007 = vmatpush1.msra.mxu0 0.0
    %1008 = vmatprep.subr.mxu0 0.0
    %1009 = vmatpush1.msra.mxu0 0.0
    %1010 = vmatprep.subr.mxu0 0.0
    %1011 = vmatpush1.msra.mxu0 0.0
    %1012 = vmatprep.subr.mxu0 0.0
    %1013 = vmatpush1.msra.mxu0 0.0
    %1014 = vmatprep.subr.mxu0 0.0
    %1015 = vmatpush1.msra.mxu0 0.0
    %1016 = vmatprep.mubr.f32.mxu0 0.0
    %1017 = vmatmul.mubr.f32.gmra.mrb[0].mxu0 %v950
    %v1018 = vpop.f32.mrb[0].mxu0
    %v1019 = vadd.f32 0.0, %v1018
    %v1020 = vpop.f32.mrb[0].mxu0
    %1021 = vdwg.mxu0
    %v1023 = vrot.slane %v1019, 3
    %v1024 = vrot.slane %v1019, 4
    %v1027 = vadd.f32 %v155, %v1023
    %v1028 = vadd.f32 %v228, %v1024
    %v1029 = vadd.f32 %v1027, %v317
    %v1030 = vadd.f32 %v1028, %v317
    %v1031 = vxor.u32 %v1029, 2147483648
    %v1032 = vxor.u32 %v1030, 2147483648
    %v1033 = vmul.f32 %v1031, 1.442695
    %v1034 = vpow.pop %v1033
    %v1035 = vmul.f32 %v1032, 1.442695
    %v1036 = vpow.pop %v1035
    %v1037 = vadd.f32 %v1034, 1.0
    %v1038 = vadd.f32 %v1036, 1.0
    %v1039 = vrcp.pop %v1037
    %v1040 = vmul.f32 1.0, %v1039
    %v1041 = vrcp.pop %v1038
    %v1042 = vmul.f32 1.0, %v1041
    %v1043 = vtanh.pop %v1029
    %v1044 = vtanh.pop %v1030
    %v1047 = vrot.slane %v929, 7
    %v1048 = vrot.slane %v930, 7
    %v1051 = vmul.f32 %v1040, %v1047
    %v1052 = vmul.f32 %v1042, %v1048
    %1055 = vrot.lane.b32.xlu0 %v1043, 32
    %v1056 = vpop.permute.xlu0 %1055
    %1057 = vrot.lane.b32.xlu0 %v1044, 32
    %v1058 = vpop.permute.xlu0 %1057
    %v1061 = vmul.f32 %v1040, %v1056
    %v1062 = vmul.f32 %v1042, %v1058
    %1065 = vrot.lane.b32.xlu0 %v1061, 32
    %v1066 = vpop.permute.xlu0 %1065
    %1067 = vrot.lane.b32.xlu0 %v1062, 32
    %v1068 = vpop.permute.xlu0 %1067
    %v1071 = vadd.f32 %v1051, %v1066
    %v1072 = vadd.f32 %v1052, %v1068
    %v1073 = vtanh.pop %v1071
    %v1074 = vtanh.pop %v1072
    %1077 = vrot.lane.b32.xlu0 %v1073, 32
    %v1078 = vpop.permute.xlu0 %1077
    %1079 = vrot.lane.b32.xlu0 %v1074, 32
    %v1080 = vpop.permute.xlu0 %1079
    %v1083 = vmul.f32 %v1040, %v1078
    %v1084 = vmul.f32 %v1042, %v1080
    %v1087 = vrot.slane %v1083, 5
    %v1088 = vrot.slane %v1084, 4
    %v1089 = vsel %vm380, %v1088, %v1087
    %1090 = vrot.lane.b32.xlu0 %v1089, 64
    %v1091 = vpop.permute.xlu0 %1090
    %v1092 = vsel %vm233, %v1091, 0
    %1094 = vmatprep.subr.mxu0 0.0
    %1095 = vmatpush1.msra.mxu0 %v75
    %1096 = vmatprep.subr.mxu0 0.0
    %1097 = vmatpush1.msra.mxu0 %v76
    %1098 = vmatprep.subr.mxu0 0.0
    %1099 = vmatpush1.msra.mxu0 %v77
    %1100 = vmatprep.subr.mxu0 0.0
    %1101 = vmatpush1.msra.mxu0 %v78
    %1102 = vmatprep.subr.mxu0 0.0
    %1103 = vmatpush1.msra.mxu0 0.0
    %1104 = vmatprep.subr.mxu0 0.0
    %1105 = vmatpush1.msra.mxu0 0.0
    %1106 = vmatprep.subr.mxu0 0.0
    %1107 = vmatpush1.msra.mxu0 0.0
    %1108 = vmatprep.subr.mxu0 0.0
    %1109 = vmatpush1.msra.mxu0 0.0
    %1110 = vmatprep.subr.mxu0 0.0
    %1111 = vmatpush1.msra.mxu0 0.0
    %1112 = vmatprep.subr.mxu0 0.0
    %1113 = vmatpush1.msra.mxu0 0.0
    %1114 = vmatprep.subr.mxu0 0.0
    %1115 = vmatpush1.msra.mxu0 0.0
    %1116 = vmatprep.subr.mxu0 0.0
    %1117 = vmatpush1.msra.mxu0 0.0
    %1118 = vmatprep.subr.mxu0 0.0
    %1119 = vmatpush1.msra.mxu0 0.0
    %1120 = vmatprep.subr.mxu0 0.0
    %1121 = vmatpush1.msra.mxu0 0.0
    %1122 = vmatprep.subr.mxu0 0.0
    %1123 = vmatpush1.msra.mxu0 0.0
    %1124 = vmatprep.subr.mxu0 0.0
    %1125 = vmatpush1.msra.mxu0 0.0
    %1126 = vmatprep.subr.mxu0 0.0
    %1127 = vmatpush1.msra.mxu0 0.0
    %1128 = vmatprep.subr.mxu0 0.0
    %1129 = vmatpush1.msra.mxu0 0.0
    %1130 = vmatprep.subr.mxu0 0.0
    %1131 = vmatpush1.msra.mxu0 0.0
    %1132 = vmatprep.subr.mxu0 0.0
    %1133 = vmatpush1.msra.mxu0 0.0
    %1134 = vmatprep.subr.mxu0 0.0
    %1135 = vmatpush1.msra.mxu0 0.0
    %1136 = vmatprep.subr.mxu0 0.0
    %1137 = vmatpush1.msra.mxu0 0.0
    %1138 = vmatprep.subr.mxu0 0.0
    %1139 = vmatpush1.msra.mxu0 0.0
    %1140 = vmatprep.subr.mxu0 0.0
    %1141 = vmatpush1.msra.mxu0 0.0
    %1142 = vmatprep.subr.mxu0 0.0
    %1143 = vmatpush1.msra.mxu0 0.0
    %1144 = vmatprep.subr.mxu0 0.0
    %1145 = vmatpush1.msra.mxu0 0.0
    %1146 = vmatprep.subr.mxu0 0.0
    %1147 = vmatpush1.msra.mxu0 0.0
    %1148 = vmatprep.subr.mxu0 0.0
    %1149 = vmatpush1.msra.mxu0 0.0
    %1150 = vmatprep.subr.mxu0 0.0
    %1151 = vmatpush1.msra.mxu0 0.0
    %1152 = vmatprep.subr.mxu0 0.0
    %1153 = vmatpush1.msra.mxu0 0.0
    %1154 = vmatprep.subr.mxu0 0.0
    %1155 = vmatpush1.msra.mxu0 0.0
    %1156 = vmatprep.subr.mxu0 0.0
    %1157 = vmatpush1.msra.mxu0 0.0
    %1158 = vmatprep.mubr.f32.mxu0 0.0
    %1159 = vmatmul.mubr.f32.gmra.mrb[0].mxu0 %v1092
    %v1160 = vpop.f32.mrb[0].mxu0
    %v1161 = vadd.f32 0.0, %v1160
    %v1162 = vpop.f32.mrb[0].mxu0
    %1163 = vdwg.mxu0
    %v1165 = vrot.slane %v1161, 2
    %v1166 = vrot.slane %v1161, 3
    %v1169 = vadd.f32 %v155, %v1165
    %v1170 = vadd.f32 %v228, %v1166
    %v1171 = vadd.f32 %v1169, %v317
    %v1172 = vadd.f32 %v1170, %v317
    %v1173 = vxor.u32 %v1171, 2147483648
    %v1174 = vxor.u32 %v1172, 2147483648
    %v1175 = vmul.f32 %v1173, 1.442695
    %v1176 = vpow.pop %v1175
    %v1177 = vmul.f32 %v1174, 1.442695
    %v1178 = vpow.pop %v1177
    %v1179 = vadd.f32 %v1176, 1.0
    %v1180 = vadd.f32 %v1178, 1.0
    %v1181 = vrcp.pop %v1179
    %v1182 = vmul.f32 1.0, %v1181
    %v1183 = vrcp.pop %v1180
    %v1184 = vmul.f32 1.0, %v1183
    %v1185 = vtanh.pop %v1171
    %v1186 = vtanh.pop %v1172
    %v1189 = vrot.slane %v1071, 7
    %v1190 = vrot.slane %v1072, 7
    %v1193 = vmul.f32 %v1182, %v1189
    %v1194 = vmul.f32 %v1184, %v1190
    %1197 = vrot.lane.b32.xlu0 %v1185, 32
    %v1198 = vpop.permute.xlu0 %1197
    %1199 = vrot.lane.b32.xlu0 %v1186, 32
    %v1200 = vpop.permute.xlu0 %1199
    %v1203 = vmul.f32 %v1182, %v1198
    %v1204 = vmul.f32 %v1184, %v1200
    %1207 = vrot.lane.b32.xlu0 %v1203, 32
    %v1208 = vpop.permute.xlu0 %1207
    %1209 = vrot.lane.b32.xlu0 %v1204, 32
    %v1210 = vpop.permute.xlu0 %1209
    %v1213 = vadd.f32 %v1193, %v1208
    %v1214 = vadd.f32 %v1194, %v1210
    %v1215 = vtanh.pop %v1213
    %v1216 = vtanh.pop %v1214
    %1219 = vrot.lane.b32.xlu0 %v1215, 32
    %v1220 = vpop.permute.xlu0 %1219
    %1221 = vrot.lane.b32.xlu0 %v1216, 32
    %v1222 = vpop.permute.xlu0 %1221
    %v1225 = vmul.f32 %v1182, %v1220
    %v1226 = vmul.f32 %v1184, %v1222
    %v1229 = vrot.slane %v1225, 6
    %v1230 = vrot.slane %v1226, 5
    %v1231 = vsel %vm380, %v1230, %v1229
    %1232 = vrot.lane.b32.xlu0 %v1231, 64
    %v1233 = vpop.permute.xlu0 %1232
    %v1234 = vsel %vm233, %v1233, 0
    %1236 = vmatprep.subr.mxu0 0.0
    %1237 = vmatpush1.msra.mxu0 %v75
    %1238 = vmatprep.subr.mxu0 0.0
    %1239 = vmatpush1.msra.mxu0 %v76
    %1240 = vmatprep.subr.mxu0 0.0
    %1241 = vmatpush1.msra.mxu0 %v77
    %1242 = vmatprep.subr.mxu0 0.0
    %1243 = vmatpush1.msra.mxu0 %v78
    %1244 = vmatprep.subr.mxu0 0.0
    %1245 = vmatpush1.msra.mxu0 0.0
    %1246 = vmatprep.subr.mxu0 0.0
    %1247 = vmatpush1.msra.mxu0 0.0
    %1248 = vmatprep.subr.mxu0 0.0
    %1249 = vmatpush1.msra.mxu0 0.0
    %1250 = vmatprep.subr.mxu0 0.0
    %1251 = vmatpush1.msra.mxu0 0.0
    %1252 = vmatprep.subr.mxu0 0.0
    %1253 = vmatpush1.msra.mxu0 0.0
    %1254 = vmatprep.subr.mxu0 0.0
    %1255 = vmatpush1.msra.mxu0 0.0
    %1256 = vmatprep.subr.mxu0 0.0
    %1257 = vmatpush1.msra.mxu0 0.0
    %1258 = vmatprep.subr.mxu0 0.0
    %1259 = vmatpush1.msra.mxu0 0.0
    %1260 = vmatprep.subr.mxu0 0.0
    %1261 = vmatpush1.msra.mxu0 0.0
    %1262 = vmatprep.subr.mxu0 0.0
    %1263 = vmatpush1.msra.mxu0 0.0
    %1264 = vmatprep.subr.mxu0 0.0
    %1265 = vmatpush1.msra.mxu0 0.0
    %1266 = vmatprep.subr.mxu0 0.0
    %1267 = vmatpush1.msra.mxu0 0.0
    %1268 = vmatprep.subr.mxu0 0.0
    %1269 = vmatpush1.msra.mxu0 0.0
    %1270 = vmatprep.subr.mxu0 0.0
    %1271 = vmatpush1.msra.mxu0 0.0
    %1272 = vmatprep.subr.mxu0 0.0
    %1273 = vmatpush1.msra.mxu0 0.0
    %1274 = vmatprep.subr.mxu0 0.0
    %1275 = vmatpush1.msra.mxu0 0.0
    %1276 = vmatprep.subr.mxu0 0.0
    %1277 = vmatpush1.msra.mxu0 0.0
    %1278 = vmatprep.subr.mxu0 0.0
    %1279 = vmatpush1.msra.mxu0 0.0
    %1280 = vmatprep.subr.mxu0 0.0
    %1281 = vmatpush1.msra.mxu0 0.0
    %1282 = vmatprep.subr.mxu0 0.0
    %1283 = vmatpush1.msra.mxu0 0.0
    %1284 = vmatprep.subr.mxu0 0.0
    %1285 = vmatpush1.msra.mxu0 0.0
    %1286 = vmatprep.subr.mxu0 0.0
    %1287 = vmatpush1.msra.mxu0 0.0
    %1288 = vmatprep.subr.mxu0 0.0
    %1289 = vmatpush1.msra.mxu0 0.0
    %1290 = vmatprep.subr.mxu0 0.0
    %1291 = vmatpush1.msra.mxu0 0.0
    %1292 = vmatprep.subr.mxu0 0.0
    %1293 = vmatpush1.msra.mxu0 0.0
    %1294 = vmatprep.subr.mxu0 0.0
    %1295 = vmatpush1.msra.mxu0 0.0
    %1296 = vmatprep.subr.mxu0 0.0
    %1297 = vmatpush1.msra.mxu0 0.0
    %1298 = vmatprep.subr.mxu0 0.0
    %1299 = vmatpush1.msra.mxu0 0.0
    %1300 = vmatprep.mubr.f32.mxu0 0.0
    %1301 = vmatmul.mubr.f32.gmra.mrb[0].mxu0 %v1234
    %v1302 = vpop.f32.mrb[0].mxu0
    %v1303 = vadd.f32 0.0, %v1302
    %v1304 = vpop.f32.mrb[0].mxu0
    %1305 = vdwg.mxu0
    %v1307 = vrot.slane %v1303, 1
    %v1308 = vrot.slane %v1303, 2
    %v1311 = vadd.f32 %v155, %v1307
    %v1312 = vadd.f32 %v228, %v1308
    %v1313 = vadd.f32 %v1311, %v317
    %v1314 = vadd.f32 %v1312, %v317
    %v1315 = vxor.u32 %v1313, 2147483648
    %v1316 = vxor.u32 %v1314, 2147483648
    %v1317 = vmul.f32 %v1315, 1.442695
    %v1318 = vpow.pop %v1317
    %v1319 = vmul.f32 %v1316, 1.442695
    %v1320 = vpow.pop %v1319
    %v1321 = vadd.f32 %v1318, 1.0
    %v1322 = vadd.f32 %v1320, 1.0
    %v1323 = vrcp.pop %v1321
    %v1324 = vmul.f32 1.0, %v1323
    %v1325 = vrcp.pop %v1322
    %v1326 = vmul.f32 1.0, %v1325
    %v1327 = vtanh.pop %v1313
    %v1328 = vtanh.pop %v1314
    %v1331 = vrot.slane %v1213, 7
    %v1332 = vrot.slane %v1214, 7
    %v1335 = vmul.f32 %v1324, %v1331
    %v1336 = vmul.f32 %v1326, %v1332
    %1339 = vrot.lane.b32.xlu0 %v1327, 32
    %v1340 = vpop.permute.xlu0 %1339
    %1341 = vrot.lane.b32.xlu0 %v1328, 32
    %v1342 = vpop.permute.xlu0 %1341
    %v1345 = vmul.f32 %v1324, %v1340
    %v1346 = vmul.f32 %v1326, %v1342
    %1349 = vrot.lane.b32.xlu0 %v1345, 32
    %v1350 = vpop.permute.xlu0 %1349
    %1351 = vrot.lane.b32.xlu0 %v1346, 32
    %v1352 = vpop.permute.xlu0 %1351
    %v1355 = vadd.f32 %v1335, %v1350
    %v1356 = vadd.f32 %v1336, %v1352
    %v1357 = vtanh.pop %v1355
    %v1358 = vtanh.pop %v1356
    %1361 = vrot.lane.b32.xlu0 %v1357, 32
    %v1362 = vpop.permute.xlu0 %1361
    %1363 = vrot.lane.b32.xlu0 %v1358, 32
    %v1364 = vpop.permute.xlu0 %1363
    %v1367 = vmul.f32 %v1324, %v1362
    %v1368 = vmul.f32 %v1326, %v1364
    %v1371 = vrot.slane %v1368, 7
    %1372 = vrot.lane.b32.xlu0 %v1367, 64
    %v1373 = vpop.permute.xlu0 %1372
    %1374 = vrot.lane.b32.xlu0 %v1371, 64
    %v1375 = vpop.permute.xlu0 %1374
    %vm1378 = vcmask 261127
    %1379 = vst.msk [vmem:[#allocation9 - $0x7] sm:$0x80] %vm1378, %v1373
    %vm1380 = vcmask 253952
    %1381 = vst.msk [vmem:[#allocation9 + $0x1] sm:$0x1] %vm1380, %v1375
    %v1384 = vrot.slane %v1356, 7
    %1385 = vrot.lane.b32.xlu0 %v1355, 96
    %v1386 = vpop.permute.xlu0 %1385
    %1387 = vrot.lane.b32.xlu0 %v1384, 96
    %v1388 = vpop.permute.xlu0 %1387
    %1391 = vst.msk [vmem:[#allocation11 - $0x7] sm:$0x80] %vm1378, %v1386
    %1392 = vst.msk [vmem:[#allocation11 + $0x1] sm:$0x1] %vm1380, %v1388
    %v1393 = vld [vmem:[%s6] sm:$0xff]
    %v1394 = vld [vmem:[%s6 + $0x8] sm:$0xff]
    %v1395 = vld [vmem:[%s6 + $0x10] sm:$0xff]
    %v1396 = vld [vmem:[%s6 + $0x18] sm:$0xff]
    %v1397 = vld [vmem:[%s7] sm:$0x1]
    %v1399 = vlaneseq
    %v1400 = vshrl.u32 %v1399, 7
    %v1401 = vsub.s32 0, %v1400
    %v1402 = vrot.slane %v1397, %v1401
    %v1404 = vrot.slane %v1367, 7
    %v1405 = vrot.slane %v1368, 6
    %v1406 = vsel %vm380, %v1405, %v1404
    %1407 = vrot.lane.b32.xlu0 %v1406, 64
    %v1408 = vpop.permute.xlu0 %1407
    %v1409 = vsel %vm233, %v1408, 0
    %1411 = vmatprep.subr.mxu0 0.0
    %1412 = vmatpush1.msra.mxu0 %v1393
    %1413 = vmatprep.subr.mxu0 0.0
    %1414 = vmatpush1.msra.mxu0 %v1394
    %1415 = vmatprep.subr.mxu0 0.0
    %1416 = vmatpush1.msra.mxu0 %v1395
    %1417 = vmatprep.subr.mxu0 0.0
    %1418 = vmatpush1.msra.mxu0 %v1396
    %1419 = vmatprep.subr.mxu0 0.0
    %1420 = vmatpush1.msra.mxu0 0.0
    %1421 = vmatprep.subr.mxu0 0.0
    %1422 = vmatpush1.msra.mxu0 0.0
    %1423 = vmatprep.subr.mxu0 0.0
    %1424 = vmatpush1.msra.mxu0 0.0
    %1425 = vmatprep.subr.mxu0 0.0
    %1426 = vmatpush1.msra.mxu0 0.0
    %1427 = vmatprep.subr.mxu0 0.0
    %1428 = vmatpush1.msra.mxu0 0.0
    %1429 = vmatprep.subr.mxu0 0.0
    %1430 = vmatpush1.msra.mxu0 0.0
    %1431 = vmatprep.subr.mxu0 0.0
    %1432 = vmatpush1.msra.mxu0 0.0
    %1433 = vmatprep.subr.mxu0 0.0
    %1434 = vmatpush1.msra.mxu0 0.0
    %1435 = vmatprep.subr.mxu0 0.0
    %1436 = vmatpush1.msra.mxu0 0.0
    %1437 = vmatprep.subr.mxu0 0.0
    %1438 = vmatpush1.msra.mxu0 0.0
    %1439 = vmatprep.subr.mxu0 0.0
    %1440 = vmatpush1.msra.mxu0 0.0
    %1441 = vmatprep.subr.mxu0 0.0
    %1442 = vmatpush1.msra.mxu0 0.0
    %1443 = vmatprep.subr.mxu0 0.0
    %1444 = vmatpush1.msra.mxu0 0.0
    %1445 = vmatprep.subr.mxu0 0.0
    %1446 = vmatpush1.msra.mxu0 0.0
    %1447 = vmatprep.subr.mxu0 0.0
    %1448 = vmatpush1.msra.mxu0 0.0
    %1449 = vmatprep.subr.mxu0 0.0
    %1450 = vmatpush1.msra.mxu0 0.0
    %1451 = vmatprep.subr.mxu0 0.0
    %1452 = vmatpush1.msra.mxu0 0.0
    %1453 = vmatprep.subr.mxu0 0.0
    %1454 = vmatpush1.msra.mxu0 0.0
    %1455 = vmatprep.subr.mxu0 0.0
    %1456 = vmatpush1.msra.mxu0 0.0
    %1457 = vmatprep.subr.mxu0 0.0
    %1458 = vmatpush1.msra.mxu0 0.0
    %1459 = vmatprep.subr.mxu0 0.0
    %1460 = vmatpush1.msra.mxu0 0.0
    %1461 = vmatprep.subr.mxu0 0.0
    %1462 = vmatpush1.msra.mxu0 0.0
    %1463 = vmatprep.subr.mxu0 0.0
    %1464 = vmatpush1.msra.mxu0 0.0
    %1465 = vmatprep.subr.mxu0 0.0
    %1466 = vmatpush1.msra.mxu0 0.0
    %1467 = vmatprep.subr.mxu0 0.0
    %1468 = vmatpush1.msra.mxu0 0.0
    %1469 = vmatprep.subr.mxu0 0.0
    %1470 = vmatpush1.msra.mxu0 0.0
    %1471 = vmatprep.subr.mxu0 0.0
    %1472 = vmatpush1.msra.mxu0 0.0
    %1473 = vmatprep.subr.mxu0 0.0
    %1474 = vmatpush1.msra.mxu0 0.0
    %1475 = vmatprep.mubr.f32.mxu0 0.0
    %1476 = vmatmul.mubr.f32.gmra.mrb[0].mxu0 %v1409
    %v1477 = vpop.f32.mrb[0].mxu0
    %v1478 = vadd.f32 %v1402, %v1477
    %v1479 = vpop.f32.mrb[0].mxu0
    %1480 = vdwg.mxu0
    %vm1481 = vcmask 33792
    %1482 = vst.msk [vmem:[#allocation8] sm:$0x3] %vm1481, %v1478
    // Predicated region
    $region46: #{tpu_custom_call.1} parent=1 // pred_check
      _
    $region47: #{tpu_custom_call.1} parent=1 // pred_check_branch
      %1484 = sbr.rel (0) target = $region49
    $region48: #{tpu_custom_call.1} parent=1 // pred_region
      %s1486 = ssub.s32 32, 32
      %1487 = vsyncadd [#allocation4], %s1486
      %s1489 = sshll.u32 [#allocation8], 4
      %s1490 = int_to_ptr.vmem [resolvable:$true] %s1489
      %1492 = dma.vmem_to_hbm [thread:$0]  %s1490, 32, %s8, [#allocation4]
    $region49: #{tpu_custom_call.1} parent=1 // pred_fallthru
      _
    // Predicated region
    $region50: #{tpu_custom_call.1} parent=1 // pred_check
      _
    $region51: #{tpu_custom_call.1} parent=1 // pred_check_branch
      %1494 = sbr.rel (0) target = $region53
    $region52: #{tpu_custom_call.1} parent=1 // pred_region
      %s1496 = ssub.s32 32, 32
      %1497 = vsyncadd [#allocation10], %s1496
      %s1499 = sshll.u32 [#allocation9], 4
      %s1500 = int_to_ptr.vmem [resolvable:$true] %s1499
      %1502 = dma.vmem_to_hbm [thread:$0]  %s1500, 32, %s9, [#allocation10]
    $region53: #{tpu_custom_call.1} parent=1 // pred_fallthru
      _
    // Predicated region
    $region54: #{tpu_custom_call.1} parent=1 // pred_check
      _
    $region55: #{tpu_custom_call.1} parent=1 // pred_check_branch
      %1504 = sbr.rel (0) target = $region57
    $region56: #{tpu_custom_call.1} parent=1 // pred_region
      %s1506 = ssub.s32 32, 32
      %1507 = vsyncadd [#allocation10], %s1506
      %s1509 = sshll.u32 [#allocation11], 4
      %s1510 = int_to_ptr.vmem [resolvable:$true] %s1509
      %1512 = dma.vmem_to_hbm [thread:$0]  %s1510, 32, %s10, [#allocation10]
    $region57: #{tpu_custom_call.1} parent=1 // pred_fallthru
      _
    // Predicated region
    $region58: #{tpu_custom_call.1} parent=1 // pred_check
      _
    $region59: #{tpu_custom_call.1} parent=1 // pred_check_branch
      %1514 = sbr.rel (0) target = $region61
    $region60: #{tpu_custom_call.1} parent=1 // pred_region
      %1515 = dma.done [#allocation4], 32
    $region61: #{tpu_custom_call.1} parent=1 // pred_fallthru
      _
    // Predicated region
    $region62: #{tpu_custom_call.1} parent=1 // pred_check
      _
    $region63: #{tpu_custom_call.1} parent=1 // pred_check_branch
      %1517 = sbr.rel (0) target = $region65
    $region64: #{tpu_custom_call.1} parent=1 // pred_region
      %1518 = dma.done [#allocation10], 32
    $region65: #{tpu_custom_call.1} parent=1 // pred_fallthru
      _
    // Predicated region
    $region66: #{tpu_custom_call.1} parent=1 // pred_check
      _
    $region67: #{tpu_custom_call.1} parent=1 // pred_check_branch
      %1520 = sbr.rel (0) target = $region69
    $region68: #{tpu_custom_call.1} parent=1 // pred_region
      %1521 = dma.done [#allocation10], 32
    $region69: #{tpu_custom_call.1} parent=1 // pred_fallthru
      _
    %1522 = vsyncpa [#allocation3], 1
    %1523 = vsyncpa [#allocation6], 1
    %1524 = vsyncpa [#allocation4], 1
    %1525 = vsyncpa [#allocation10], 1

</llo_original>
